<compile_context>
chip_gen: v6e
topology: v6e:2x2x1
jax: 0.10.0
libtpu: 0.0.40
codegen_flags: <defaults>
</compile_context>

<pallas_src>
import jax
import jax.numpy as jnp
import numpy as np
from jax import lax
from jax.experimental import pallas as pl
from jax.experimental.pallas import tpu as pltpu


def _row_scale_kernel(noise_ref, x_ref, o_ref):
    # noise_ref: (TN, 1) float32 ; x_ref / o_ref: (TN, TD) tiles.
    # Pure VPU broadcasted multiply -- fully hidden under the DMA pipeline.
    o_ref[...] = x_ref[...] * noise_ref[...].astype(x_ref.dtype)


def _choose_tiles(n: int, d: int, itemsize: int):
    """Pick (TN, TD) so one activation tile is ~4 MiB and lane-dense."""
    # Sublane tile: full N if small (block == full dim is always legal),
    # otherwise 128 (a multiple of 8/16/32 -> legal for every dtype).
    tn = n if n <= 128 else 128
    # Lane tile: ~4 MiB / (tn * itemsize), rounded down to a multiple of 128.
    target_bytes = 4 * 1024 * 1024
    td_cap = max(128, (target_bytes // (tn * itemsize)) // 128 * 128)
    td = d if d <= td_cap else td_cap
    return tn, td


def _apply_row_noise(x2, noise_rows, *, min_pallas_bytes=1 << 20):
    """out[i, :] = x2[i, :] * noise_rows[i, 0], tiled and pipelined over (N, D)."""
    n, d = x2.shape
    itemsize = jnp.dtype(x2.dtype).itemsize

    # Small-tensor fallback: launch + per-step overhead would dominate, and XLA
    # fuses a broadcasted multiply into neighbors for free.
    if n * d * itemsize < min_pallas_bytes:
        return x2 * noise_rows.astype(x2.dtype)

    tn, td = _choose_tiles(n, d, itemsize)
    grid = (pl.cdiv(n, tn), pl.cdiv(d, td))
    return pl.pallas_call(
        _row_scale_kernel,
        out_shape=jax.ShapeDtypeStruct((n, d), x2.dtype),
        grid=grid,
        in_specs=[
            pl.BlockSpec((tn, 1), lambda i, j: (i, 0)),    # per-row noise (invariant in j)
            pl.BlockSpec((tn, td), lambda i, j: (i, j)),   # activation tile
        ],
        out_specs=pl.BlockSpec((tn, td), lambda i, j: (i, j)),
        compiler_params=pltpu.CompilerParams(
            # No cross-iteration state: both axes are safe to shard (v7x megacore).
            dimension_semantics=("parallel", "parallel"),
            # 2x(in)+2x(out) 4 MiB tiles + noise ~= 16 MiB < 32 MiB scoped budget
            # (fits v7x's 64 MiB physical VMEM with headroom; v5e default is 16 MiB).
            vmem_limit_bytes=32 * 1024 * 1024,
        ),
        cost_estimate=pl.CostEstimate(
            flops=n * d,
            transcendentals=0,
            bytes_accessed=2 * n * d * itemsize + n * 4,
        ),
    )(noise_rows, x2)


def stochastic_depth(x, p: float, mode: str, training: bool = True, key=None):
    """JAX/Pallas equivalent of StochasticDepth.forward."""
    if p < 0.0 or p > 1.0:
        raise ValueError(f"drop probability has to be between 0 and 1, but got {p}")
    if mode not in ("batch", "row"):
        raise ValueError(f"mode has to be either 'batch' or 'row', but got {mode}")
    if (not training) or p == 0.0:
        return x

    n = x.shape[0]
    d = int(np.prod(x.shape[1:])) if x.ndim > 1 else 1
    if n == 0 or d == 0:
        return x

    if key is None:
        # A fresh key per call is required so each step draws a new drop pattern.
        raise ValueError(
            "stochastic_depth requires a PRNG key when training=True and p > 0"
        )

    survival_rate = 1.0 - p
    inv = (1.0 / survival_rate) if survival_rate > 0.0 else 0.0
    x2 = x.reshape(n, d)

    if mode == "row":
        keep = jax.random.bernoulli(key, survival_rate, shape=(n,))
        noise_rows = (keep.astype(jnp.float32) * inv).reshape(n, 1)
        out = _apply_row_noise(x2, noise_rows)
    else:  # "batch": one scalar draw; constant scale -> pure XLA, and when the
        # whole batch is dropped the activation is never read from HBM.
        keep = jax.random.bernoulli(key, survival_rate, shape=())
        out = lax.cond(
            keep,
            lambda xx: xx * jnp.asarray(inv, dtype=xx.dtype),
            lambda xx: jnp.zeros_like(xx),
            x2,
        )

    return out.reshape(x.shape)


class StochasticDepthPallas:
    """Mirror of the PyTorch module (no parameters)."""

    def __init__(self, p: float, mode: str):
        self.p = p
        self.mode = mode
        self.training = True

    def __call__(self, x, key=None):
        return stochastic_depth(x, self.p, self.mode, self.training, key=key)


if __name__ == "__main__":
    key = jax.random.PRNGKey(0)

    # Small NCHW input consistent with an EfficientNet residual branch
    # (exercises the small-tensor jnp fallback path).
    x = jax.random.normal(key, (2, 4, 16, 16), dtype=jnp.float32)

    # Medium NCHW input (2 MiB) that goes through the Pallas streaming kernel.
    x_big = jax.random.normal(jax.random.PRNGKey(1), (8, 64, 32, 32), dtype=jnp.float32)

    # "row" mode (the one EfficientNet uses), training=True.
    mod_row = StochasticDepthPallas(p=0.2, mode="row")
    y_row = jax.block_until_ready(mod_row(x, key=jax.random.PRNGKey(123)))
    y_row_big = jax.block_until_ready(mod_row(x_big, key=jax.random.PRNGKey(321)))

    # "batch" mode.
    mod_batch = StochasticDepthPallas(p=0.5, mode="batch")
    y_batch = jax.block_until_ready(mod_batch(x, key=jax.random.PRNGKey(7)))

    # eval / p==0 path -> identity (pure passthrough, no kernel needed).
    mod_eval = StochasticDepthPallas(p=0.2, mode="row")
    mod_eval.training = False
    y_eval = jax.block_until_ready(mod_eval(x))

    # Sanity: each row of the 'row' output is either 0 or x / (1-p).
    sr = 1.0 - 0.2
    for name, xin, yout in (("small", x, y_row), ("big", x_big, y_row_big)):
        for i in range(xin.shape[0]):
            row = np.asarray(yout[i])
            ref_kept = np.asarray(xin[i]) / sr
            ok = np.allclose(row, 0.0) or np.allclose(row, ref_kept, rtol=1e-5, atol=1e-5)
            assert ok, f"row-mode ({name}) output is neither dropped nor scaled copy"

    # Sanity: batch mode is either all-zero or the whole tensor scaled by 1/(1-p).
    yb = np.asarray(y_batch)
    ok_b = np.allclose(yb, 0.0) or np.allclose(
        yb, np.asarray(x) / 0.5, rtol=1e-5, atol=1e-5
    )
    assert ok_b, "batch-mode output is neither dropped nor scaled copy"

    # Sanity: eval path must be identity.
    assert np.allclose(np.asarray(y_eval), np.asarray(x)), "eval path must be identity"

    print("KERNEL_OK")
</pallas_src>

<mosaic_0001>
module attributes {stable_mosaic.version = 11 : i64} {
  func.func @_row_scale_kernel(%arg0: i32, %arg1: i32, %arg2: memref<8x1xf32, #tpu.memory_space<vmem>>, %arg3: memref<8x65536xf32, #tpu.memory_space<vmem>>, %arg4: memref<8x65536xf32, #tpu.memory_space<vmem>>) attributes {dimension_semantics = [#tpu.dimension_semantics<parallel>, #tpu.dimension_semantics<parallel>], iteration_bounds = array<i64: 1, 1>, scalar_prefetch = 0 : i64, scratch_operands = 0 : i64, tpu.core_type = #tpu.core_type<tc>, window_params = [{transform_indices = @transform_0, window_bounds = array<i64: 8, 1>}, {transform_indices = @transform_1, window_bounds = array<i64: 8, 65536>}, {transform_indices = @transform_2, window_bounds = array<i64: 8, 65536>}]} {
    %c0 = arith.constant 0 : index
    %c0_0 = arith.constant 0 : index
    %0 = vector.load %arg3[%c0, %c0_0] : memref<8x65536xf32, #tpu.memory_space<vmem>>, vector<8x65536xf32>
    %c0_1 = arith.constant 0 : index
    %c0_2 = arith.constant 0 : index
    %1 = vector.load %arg2[%c0_1, %c0_2] : memref<8x1xf32, #tpu.memory_space<vmem>>, vector<8x1xf32>
    %2 = vector.broadcast %1 : vector<8x1xf32> to vector<8x65536xf32>
    %3 = arith.mulf %0, %2 : vector<8x65536xf32>
    %c0_3 = arith.constant 0 : index
    %c0_4 = arith.constant 0 : index
    %4 = vector.load %arg4[%c0_3, %c0_4] : memref<8x65536xf32, #tpu.memory_space<vmem>>, vector<8x65536xf32>
    tpu.vector_store %arg4[%c0_3, %c0_4], %3 {strides = array<i32>} : memref<8x65536xf32, #tpu.memory_space<vmem>>, vector<8x65536xf32>,
    return
  }
  func.func @transform_0(%arg0: i32, %arg1: i32) -> (i32, i32) {
    %c0_i32 = arith.constant 0 : i32
    %c0_i32_0 = arith.constant 0 : i32
    return %arg0, %c0_i32 : i32, i32
  }
  func.func @transform_1(%arg0: i32, %arg1: i32) -> (i32, i32) {
    %c0_i32 = arith.constant 0 : i32
    return %arg0, %arg1 : i32, i32
  }
  func.func @transform_2(%arg0: i32, %arg1: i32) -> (i32, i32) {
    %c0_i32 = arith.constant 0 : i32
    return %arg0, %arg1 : i32, i32
  }
}

</mosaic_0001>

<llo_original>
// kernel: tpu_custom_call.1
$region0: #{tpu_custom_call.1}
  #allocation0 [shape = 'u32[]', space=smem, size = 0x4, offset = 0x4, fixed_abs, tag = 'smem constant byte address 0x4 - core index']
  #allocation1 [shape = 'u32[144,128]{1,0:T(1,128)}', space=vmem, size = 0x12000, scoped, tag = 'internal scratch']
  %s0 = inlined_call_operand.vmem [shape: f32[8,1], index: 0, kind: input, shape index: {}]
  %s1 = inlined_call_operand.hbm [shape: f32[8,65536], index: 1, kind: input, shape index: {}]
  %s2 = inlined_call_operand.hbm [shape: f32[8,65536], index: 2, kind: output, shape index: {}]
  %s3 = sld [smem:[#allocation0]]
  $region22: #{tpu_custom_call.1} parent=0
    _
  %s5 = ssub.s32 1, %s3
  %s6 = scalar_select 0, %s5, %s3
  $region1: #{tpu_custom_call.1} parent=0
    #allocation2 [shape = 'u8[2097152]{0}', space=vmem, size = 0x200000, scoped, tag = 'input window, operand 1, single buffered']
    #allocation3 [shape = 's32[1]{0}', space=sflag, size = 0x4, scoped, tag = 'scoped memory for tpu_custom_call.1']
    #allocation4 [shape = 's32[1]{0}', space=sflag, size = 0x4, scoped, tag = 'scoped memory for tpu_custom_call.1']
    #allocation5 [shape = 'u8[2097152]{0}', space=vmem, size = 0x200000, scoped, tag = 'output window, operand 0, single buffered']
    %7 = vsyncpa [#allocation3], 0
    %8 = vsyncpa [#allocation4], 0
    // Predicated region
    $region2: #{tpu_custom_call.1} parent=1 // pred_check
      _
    $region3: #{tpu_custom_call.1} parent=1 // pred_check_branch
      %10 = sbr.rel (0) target = $region5
    $region4: #{tpu_custom_call.1} parent=1 // pred_region
      _
    $region5: #{tpu_custom_call.1} parent=1 // pred_fallthru
      _
    // Predicated region
    $region6: #{tpu_custom_call.1} parent=1 // pred_check
      _
    $region7: #{tpu_custom_call.1} parent=1 // pred_check_branch
      %12 = sbr.rel (0) target = $region9
    $region8: #{tpu_custom_call.1} parent=1 // pred_region
      %s14 = ssub.s32 65536, 65536
      %15 = vsyncadd [#allocation3], %s14
      %s17 = sshll.u32 [#allocation2], 4
      %s18 = int_to_ptr.vmem [resolvable:$true] %s17
      %20 = dma.hbm_to_vmem [thread:$0]  %s1, 65536, %s18, [#allocation3]
    $region9: #{tpu_custom_call.1} parent=1 // pred_fallthru
      _
    // Predicated region
    $region10: #{tpu_custom_call.1} parent=1 // pred_check
      _
    $region11: #{tpu_custom_call.1} parent=1 // pred_check_branch
      %22 = sbr.rel (0) target = $region13
    $region12: #{tpu_custom_call.1} parent=1 // pred_region
      %23 = dma.done [#allocation3], 65536
    $region13: #{tpu_custom_call.1} parent=1 // pred_fallthru
      _
    %v24 = vld [vmem:[#allocation2] sm:$0xff]
    %v25 = vld [vmem:[#allocation2 + $0x8] sm:$0xff]
    %v26 = vld [vmem:[#allocation2 + $0x10] sm:$0xff]
    %v27 = vld [vmem:[#allocation2 + $0x18] sm:$0xff]
    %v28 = vld [vmem:[#allocation2 + $0x20] sm:$0xff]
    %v29 = vld [vmem:[#allocation2 + $0x28] sm:$0xff]
    %v30 = vld [vmem:[#allocation2 + $0x30] sm:$0xff]
    %v31 = vld [vmem:[#allocation2 + $0x38] sm:$0xff]
    %v32 = vld [vmem:[#allocation2 + $0x40] sm:$0xff]
    %v33 = vld [vmem:[#allocation2 + $0x48] sm:$0xff]
    %v34 = vld [vmem:[#allocation2 + $0x50] sm:$0xff]
    %v35 = vld [vmem:[#allocation2 + $0x58] sm:$0xff]
    %v36 = vld [vmem:[#allocation2 + $0x60] sm:$0xff]
    %v37 = vld [vmem:[#allocation2 + $0x68] sm:$0xff]
    %v38 = vld [vmem:[#allocation2 + $0x70] sm:$0xff]
    %v39 = vld [vmem:[#allocation2 + $0x78] sm:$0xff]
    %v40 = vld [vmem:[#allocation2 + $0x80] sm:$0xff]
    %v41 = vld [vmem:[#allocation2 + $0x88] sm:$0xff]
    %v42 = vld [vmem:[#allocation2 + $0x90] sm:$0xff]
    %v43 = vld [vmem:[#allocation2 + $0x98] sm:$0xff]
    %v44 = vld [vmem:[#allocation2 + $0xa0] sm:$0xff]
    %v45 = vld [vmem:[#allocation2 + $0xa8] sm:$0xff]
    %v46 = vld [vmem:[#allocation2 + $0xb0] sm:$0xff]
    %v47 = vld [vmem:[#allocation2 + $0xb8] sm:$0xff]
    %v48 = vld [vmem:[#allocation2 + $0xc0] sm:$0xff]
    %v49 = vld [vmem:[#allocation2 + $0xc8] sm:$0xff]
    %v50 = vld [vmem:[#allocation2 + $0xd0] sm:$0xff]
    %v51 = vld [vmem:[#allocation2 + $0xd8] sm:$0xff]
    %v52 = vld [vmem:[#allocation2 + $0xe0] sm:$0xff]
    %v53 = vld [vmem:[#allocation2 + $0xe8] sm:$0xff]
    %v54 = vld [vmem:[#allocation2 + $0xf0] sm:$0xff]
    %v55 = vld [vmem:[#allocation2 + $0xf8] sm:$0xff]
    %v56 = vld [vmem:[#allocation2 + $0x100] sm:$0xff]
    %v57 = vld [vmem:[#allocation2 + $0x108] sm:$0xff]
    %v58 = vld [vmem:[#allocation2 + $0x110] sm:$0xff]
    %v59 = vld [vmem:[#allocation2 + $0x118] sm:$0xff]
    %v60 = vld [vmem:[#allocation2 + $0x120] sm:$0xff]
    %v61 = vld [vmem:[#allocation2 + $0x128] sm:$0xff]
    %v62 = vld [vmem:[#allocation2 + $0x130] sm:$0xff]
    %v63 = vld [vmem:[#allocation2 + $0x138] sm:$0xff]
    %v64 = vld [vmem:[#allocation2 + $0x140] sm:$0xff]
    %v65 = vld [vmem:[#allocation2 + $0x148] sm:$0xff]
    %v66 = vld [vmem:[#allocation2 + $0x150] sm:$0xff]
    %v67 = vld [vmem:[#allocation2 + $0x158] sm:$0xff]
    %v68 = vld [vmem:[#allocation2 + $0x160] sm:$0xff]
    %v69 = vld [vmem:[#allocation2 + $0x168] sm:$0xff]
    %v70 = vld [vmem:[#allocation2 + $0x170] sm:$0xff]
    %v71 = vld [vmem:[#allocation2 + $0x178] sm:$0xff]
    %v72 = vld [vmem:[#allocation2 + $0x180] sm:$0xff]
    %v73 = vld [vmem:[#allocation2 + $0x188] sm:$0xff]
    %v74 = vld [vmem:[#allocation2 + $0x190] sm:$0xff]
    %v75 = vld [vmem:[#allocation2 + $0x198] sm:$0xff]
    %v76 = vld [vmem:[#allocation2 + $0x1a0] sm:$0xff]
    %v77 = vld [vmem:[#allocation2 + $0x1a8] sm:$0xff]
    %v78 = vld [vmem:[#allocation2 + $0x1b0] sm:$0xff]
    %v79 = vld [vmem:[#allocation2 + $0x1b8] sm:$0xff]
    %v80 = vld [vmem:[#allocation2 + $0x1c0] sm:$0xff]
    %v81 = vld [vmem:[#allocation2 + $0x1c8] sm:$0xff]
    %v82 = vld [vmem:[#allocation2 + $0x1d0] sm:$0xff]
    %v83 = vld [vmem:[#allocation2 + $0x1d8] sm:$0xff]
    %v84 = vld [vmem:[#allocation2 + $0x1e0] sm:$0xff]
    %v85 = vld [vmem:[#allocation2 + $0x1e8] sm:$0xff]
    %v86 = vld [vmem:[#allocation2 + $0x1f0] sm:$0xff]
    %v87 = vld [vmem:[#allocation2 + $0x1f8] sm:$0xff]
    %v88 = vld [vmem:[#allocation2 + $0x200] sm:$0xff]
    %v89 = vld [vmem:[#allocation2 + $0x208] sm:$0xff]
    %v90 = vld [vmem:[#allocation2 + $0x210] sm:$0xff]
    %v91 = vld [vmem:[#allocation2 + $0x218] sm:$0xff]
    %v92 = vld [vmem:[#allocation2 + $0x220] sm:$0xff]
    %v93 = vld [vmem:[#allocation2 + $0x228] sm:$0xff]
    %v94 = vld [vmem:[#allocation2 + $0x230] sm:$0xff]
    %v95 = vld [vmem:[#allocation2 + $0x238] sm:$0xff]
    %v96 = vld [vmem:[#allocation2 + $0x240] sm:$0xff]
    %v97 = vld [vmem:[#allocation2 + $0x248] sm:$0xff]
    %v98 = vld [vmem:[#allocation2 + $0x250] sm:$0xff]
    %v99 = vld [vmem:[#allocation2 + $0x258] sm:$0xff]
    %v100 = vld [vmem:[#allocation2 + $0x260] sm:$0xff]
    %v101 = vld [vmem:[#allocation2 + $0x268] sm:$0xff]
    %v102 = vld [vmem:[#allocation2 + $0x270] sm:$0xff]
    %v103 = vld [vmem:[#allocation2 + $0x278] sm:$0xff]
    %v104 = vld [vmem:[#allocation2 + $0x280] sm:$0xff]
    %v105 = vld [vmem:[#allocation2 + $0x288] sm:$0xff]
    %v106 = vld [vmem:[#allocation2 + $0x290] sm:$0xff]
    %v107 = vld [vmem:[#allocation2 + $0x298] sm:$0xff]
    %v108 = vld [vmem:[#allocation2 + $0x2a0] sm:$0xff]
    %v109 = vld [vmem:[#allocation2 + $0x2a8] sm:$0xff]
    %v110 = vld [vmem:[#allocation2 + $0x2b0] sm:$0xff]
    %v111 = vld [vmem:[#allocation2 + $0x2b8] sm:$0xff]
    %v112 = vld [vmem:[#allocation2 + $0x2c0] sm:$0xff]
    %v113 = vld [vmem:[#allocation2 + $0x2c8] sm:$0xff]
    %v114 = vld [vmem:[#allocation2 + $0x2d0] sm:$0xff]
    %v115 = vld [vmem:[#allocation2 + $0x2d8] sm:$0xff]
    %v116 = vld [vmem:[#allocation2 + $0x2e0] sm:$0xff]
    %v117 = vld [vmem:[#allocation2 + $0x2e8] sm:$0xff]
    %v118 = vld [vmem:[#allocation2 + $0x2f0] sm:$0xff]
    %v119 = vld [vmem:[#allocation2 + $0x2f8] sm:$0xff]
    %v120 = vld [vmem:[#allocation2 + $0x300] sm:$0xff]
    %v121 = vld [vmem:[#allocation2 + $0x308] sm:$0xff]
    %v122 = vld [vmem:[#allocation2 + $0x310] sm:$0xff]
    %v123 = vld [vmem:[#allocation2 + $0x318] sm:$0xff]
    %v124 = vld [vmem:[#allocation2 + $0x320] sm:$0xff]
    %v125 = vld [vmem:[#allocation2 + $0x328] sm:$0xff]
    %v126 = vld [vmem:[#allocation2 + $0x330] sm:$0xff]
    %v127 = vld [vmem:[#allocation2 + $0x338] sm:$0xff]
    %v128 = vld [vmem:[#allocation2 + $0x340] sm:$0xff]
    %v129 = vld [vmem:[#allocation2 + $0x348] sm:$0xff]
    %v130 = vld [vmem:[#allocation2 + $0x350] sm:$0xff]
    %v131 = vld [vmem:[#allocation2 + $0x358] sm:$0xff]
    %v132 = vld [vmem:[#allocation2 + $0x360] sm:$0xff]
    %v133 = vld [vmem:[#allocation2 + $0x368] sm:$0xff]
    %v134 = vld [vmem:[#allocation2 + $0x370] sm:$0xff]
    %v135 = vld [vmem:[#allocation2 + $0x378] sm:$0xff]
    %v136 = vld [vmem:[#allocation2 + $0x380] sm:$0xff]
    %v137 = vld [vmem:[#allocation2 + $0x388] sm:$0xff]
    %v138 = vld [vmem:[#allocation2 + $0x390] sm:$0xff]
    %v139 = vld [vmem:[#allocation2 + $0x398] sm:$0xff]
    %v140 = vld [vmem:[#allocation2 + $0x3a0] sm:$0xff]
    %v141 = vld [vmem:[#allocation2 + $0x3a8] sm:$0xff]
    %v142 = vld [vmem:[#allocation2 + $0x3b0] sm:$0xff]
    %v143 = vld [vmem:[#allocation2 + $0x3b8] sm:$0xff]
    %v144 = vld [vmem:[#allocation2 + $0x3c0] sm:$0xff]
    %v145 = vld [vmem:[#allocation2 + $0x3c8] sm:$0xff]
    %v146 = vld [vmem:[#allocation2 + $0x3d0] sm:$0xff]
    %v147 = vld [vmem:[#allocation2 + $0x3d8] sm:$0xff]
    %v148 = vld [vmem:[#allocation2 + $0x3e0] sm:$0xff]
    %v149 = vld [vmem:[#allocation2 + $0x3e8] sm:$0xff]
    %v150 = vld [vmem:[#allocation2 + $0x3f0] sm:$0xff]
    %v151 = vld [vmem:[#allocation2 + $0x3f8] sm:$0xff]
    %v152 = vld [vmem:[#allocation2 + $0x400] sm:$0xff]
    %v153 = vld [vmem:[#allocation2 + $0x408] sm:$0xff]
    %v154 = vld [vmem:[#allocation2 + $0x410] sm:$0xff]
    %v155 = vld [vmem:[#allocation2 + $0x418] sm:$0xff]
    %v156 = vld [vmem:[#allocation2 + $0x420] sm:$0xff]
    %v157 = vld [vmem:[#allocation2 + $0x428] sm:$0xff]
    %v158 = vld [vmem:[#allocation2 + $0x430] sm:$0xff]
    %v159 = vld [vmem:[#allocation2 + $0x438] sm:$0xff]
    %v160 = vld [vmem:[#allocation2 + $0x440] sm:$0xff]
    %v161 = vld [vmem:[#allocation2 + $0x448] sm:$0xff]
    %v162 = vld [vmem:[#allocation2 + $0x450] sm:$0xff]
    %v163 = vld [vmem:[#allocation2 + $0x458] sm:$0xff]
    %v164 = vld [vmem:[#allocation2 + $0x460] sm:$0xff]
    %v165 = vld [vmem:[#allocation2 + $0x468] sm:$0xff]
    %v166 = vld [vmem:[#allocation2 + $0x470] sm:$0xff]
    %v167 = vld [vmem:[#allocation2 + $0x478] sm:$0xff]
    %v168 = vld [vmem:[#allocation2 + $0x480] sm:$0xff]
    %v169 = vld [vmem:[#allocation2 + $0x488] sm:$0xff]
    %v170 = vld [vmem:[#allocation2 + $0x490] sm:$0xff]
    %v171 = vld [vmem:[#allocation2 + $0x498] sm:$0xff]
    %v172 = vld [vmem:[#allocation2 + $0x4a0] sm:$0xff]
    %v173 = vld [vmem:[#allocation2 + $0x4a8] sm:$0xff]
    %v174 = vld [vmem:[#allocation2 + $0x4b0] sm:$0xff]
    %v175 = vld [vmem:[#allocation2 + $0x4b8] sm:$0xff]
    %v176 = vld [vmem:[#allocation2 + $0x4c0] sm:$0xff]
    %v177 = vld [vmem:[#allocation2 + $0x4c8] sm:$0xff]
    %v178 = vld [vmem:[#allocation2 + $0x4d0] sm:$0xff]
    %v179 = vld [vmem:[#allocation2 + $0x4d8] sm:$0xff]
    %v180 = vld [vmem:[#allocation2 + $0x4e0] sm:$0xff]
    %v181 = vld [vmem:[#allocation2 + $0x4e8] sm:$0xff]
    %v182 = vld [vmem:[#allocation2 + $0x4f0] sm:$0xff]
    %v183 = vld [vmem:[#allocation2 + $0x4f8] sm:$0xff]
    %v184 = vld [vmem:[#allocation2 + $0x500] sm:$0xff]
    %v185 = vld [vmem:[#allocation2 + $0x508] sm:$0xff]
    %v186 = vld [vmem:[#allocation2 + $0x510] sm:$0xff]
    %v187 = vld [vmem:[#allocation2 + $0x518] sm:$0xff]
    %v188 = vld [vmem:[#allocation2 + $0x520] sm:$0xff]
    %v189 = vld [vmem:[#allocation2 + $0x528] sm:$0xff]
    %v190 = vld [vmem:[#allocation2 + $0x530] sm:$0xff]
    %v191 = vld [vmem:[#allocation2 + $0x538] sm:$0xff]
    %v192 = vld [vmem:[#allocation2 + $0x540] sm:$0xff]
    %v193 = vld [vmem:[#allocation2 + $0x548] sm:$0xff]
    %v194 = vld [vmem:[#allocation2 + $0x550] sm:$0xff]
    %v195 = vld [vmem:[#allocation2 + $0x558] sm:$0xff]
    %v196 = vld [vmem:[#allocation2 + $0x560] sm:$0xff]
    %v197 = vld [vmem:[#allocation2 + $0x568] sm:$0xff]
    %v198 = vld [vmem:[#allocation2 + $0x570] sm:$0xff]
    %v199 = vld [vmem:[#allocation2 + $0x578] sm:$0xff]
    %v200 = vld [vmem:[#allocation2 + $0x580] sm:$0xff]
    %v201 = vld [vmem:[#allocation2 + $0x588] sm:$0xff]
    %v202 = vld [vmem:[#allocation2 + $0x590] sm:$0xff]
    %v203 = vld [vmem:[#allocation2 + $0x598] sm:$0xff]
    %v204 = vld [vmem:[#allocation2 + $0x5a0] sm:$0xff]
    %v205 = vld [vmem:[#allocation2 + $0x5a8] sm:$0xff]
    %v206 = vld [vmem:[#allocation2 + $0x5b0] sm:$0xff]
    %v207 = vld [vmem:[#allocation2 + $0x5b8] sm:$0xff]
    %v208 = vld [vmem:[#allocation2 + $0x5c0] sm:$0xff]
    %v209 = vld [vmem:[#allocation2 + $0x5c8] sm:$0xff]
    %v210 = vld [vmem:[#allocation2 + $0x5d0] sm:$0xff]
    %v211 = vld [vmem:[#allocation2 + $0x5d8] sm:$0xff]
    %v212 = vld [vmem:[#allocation2 + $0x5e0] sm:$0xff]
    %v213 = vld [vmem:[#allocation2 + $0x5e8] sm:$0xff]
    %v214 = vld [vmem:[#allocation2 + $0x5f0] sm:$0xff]
    %v215 = vld [vmem:[#allocation2 + $0x5f8] sm:$0xff]
    %v216 = vld [vmem:[#allocation2 + $0x600] sm:$0xff]
    %v217 = vld [vmem:[#allocation2 + $0x608] sm:$0xff]
    %v218 = vld [vmem:[#allocation2 + $0x610] sm:$0xff]
    %v219 = vld [vmem:[#allocation2 + $0x618] sm:$0xff]
    %v220 = vld [vmem:[#allocation2 + $0x620] sm:$0xff]
    %v221 = vld [vmem:[#allocation2 + $0x628] sm:$0xff]
    %v222 = vld [vmem:[#allocation2 + $0x630] sm:$0xff]
    %v223 = vld [vmem:[#allocation2 + $0x638] sm:$0xff]
    %v224 = vld [vmem:[#allocation2 + $0x640] sm:$0xff]
    %v225 = vld [vmem:[#allocation2 + $0x648] sm:$0xff]
    %v226 = vld [vmem:[#allocation2 + $0x650] sm:$0xff]
    %v227 = vld [vmem:[#allocation2 + $0x658] sm:$0xff]
    %v228 = vld [vmem:[#allocation2 + $0x660] sm:$0xff]
    %v229 = vld [vmem:[#allocation2 + $0x668] sm:$0xff]
    %v230 = vld [vmem:[#allocation2 + $0x670] sm:$0xff]
    %v231 = vld [vmem:[#allocation2 + $0x678] sm:$0xff]
    %v232 = vld [vmem:[#allocation2 + $0x680] sm:$0xff]
    %v233 = vld [vmem:[#allocation2 + $0x688] sm:$0xff]
    %v234 = vld [vmem:[#allocation2 + $0x690] sm:$0xff]
    %v235 = vld [vmem:[#allocation2 + $0x698] sm:$0xff]
    %v236 = vld [vmem:[#allocation2 + $0x6a0] sm:$0xff]
    %v237 = vld [vmem:[#allocation2 + $0x6a8] sm:$0xff]
    %v238 = vld [vmem:[#allocation2 + $0x6b0] sm:$0xff]
    %v239 = vld [vmem:[#allocation2 + $0x6b8] sm:$0xff]
    %v240 = vld [vmem:[#allocation2 + $0x6c0] sm:$0xff]
    %v241 = vld [vmem:[#allocation2 + $0x6c8] sm:$0xff]
    %v242 = vld [vmem:[#allocation2 + $0x6d0] sm:$0xff]
    %v243 = vld [vmem:[#allocation2 + $0x6d8] sm:$0xff]
    %v244 = vld [vmem:[#allocation2 + $0x6e0] sm:$0xff]
    %v245 = vld [vmem:[#allocation2 + $0x6e8] sm:$0xff]
    %v246 = vld [vmem:[#allocation2 + $0x6f0] sm:$0xff]
    %v247 = vld [vmem:[#allocation2 + $0x6f8] sm:$0xff]
    %v248 = vld [vmem:[#allocation2 + $0x700] sm:$0xff]
    %v249 = vld [vmem:[#allocation2 + $0x708] sm:$0xff]
    %v250 = vld [vmem:[#allocation2 + $0x710] sm:$0xff]
    %v251 = vld [vmem:[#allocation2 + $0x718] sm:$0xff]
    %v252 = vld [vmem:[#allocation2 + $0x720] sm:$0xff]
    %v253 = vld [vmem:[#allocation2 + $0x728] sm:$0xff]
    %v254 = vld [vmem:[#allocation2 + $0x730] sm:$0xff]
    %v255 = vld [vmem:[#allocation2 + $0x738] sm:$0xff]
    %v256 = vld [vmem:[#allocation2 + $0x740] sm:$0xff]
    %v257 = vld [vmem:[#allocation2 + $0x748] sm:$0xff]
    %v258 = vld [vmem:[#allocation2 + $0x750] sm:$0xff]
    %v259 = vld [vmem:[#allocation2 + $0x758] sm:$0xff]
    %v260 = vld [vmem:[#allocation2 + $0x760] sm:$0xff]
    %v261 = vld [vmem:[#allocation2 + $0x768] sm:$0xff]
    %v262 = vld [vmem:[#allocation2 + $0x770] sm:$0xff]
    %v263 = vld [vmem:[#allocation2 + $0x778] sm:$0xff]
    %v264 = vld [vmem:[#allocation2 + $0x780] sm:$0xff]
    %v265 = vld [vmem:[#allocation2 + $0x788] sm:$0xff]
    %v266 = vld [vmem:[#allocation2 + $0x790] sm:$0xff]
    %v267 = vld [vmem:[#allocation2 + $0x798] sm:$0xff]
    %v268 = vld [vmem:[#allocation2 + $0x7a0] sm:$0xff]
    %v269 = vld [vmem:[#allocation2 + $0x7a8] sm:$0xff]
    %v270 = vld [vmem:[#allocation2 + $0x7b0] sm:$0xff]
    %v271 = vld [vmem:[#allocation2 + $0x7b8] sm:$0xff]
    %v272 = vld [vmem:[#allocation2 + $0x7c0] sm:$0xff]
    %v273 = vld [vmem:[#allocation2 + $0x7c8] sm:$0xff]
    %v274 = vld [vmem:[#allocation2 + $0x7d0] sm:$0xff]
    %v275 = vld [vmem:[#allocation2 + $0x7d8] sm:$0xff]
    %v276 = vld [vmem:[#allocation2 + $0x7e0] sm:$0xff]
    %v277 = vld [vmem:[#allocation2 + $0x7e8] sm:$0xff]
    %v278 = vld [vmem:[#allocation2 + $0x7f0] sm:$0xff]
    %v279 = vld [vmem:[#allocation2 + $0x7f8] sm:$0xff]
    %v280 = vld [vmem:[#allocation2 + $0x800] sm:$0xff]
    %v281 = vld [vmem:[#allocation2 + $0x808] sm:$0xff]
    %v282 = vld [vmem:[#allocation2 + $0x810] sm:$0xff]
    %v283 = vld [vmem:[#allocation2 + $0x818] sm:$0xff]
    %v284 = vld [vmem:[#allocation2 + $0x820] sm:$0xff]
    %v285 = vld [vmem:[#allocation2 + $0x828] sm:$0xff]
    %v286 = vld [vmem:[#allocation2 + $0x830] sm:$0xff]
    %v287 = vld [vmem:[#allocation2 + $0x838] sm:$0xff]
    %v288 = vld [vmem:[#allocation2 + $0x840] sm:$0xff]
    %v289 = vld [vmem:[#allocation2 + $0x848] sm:$0xff]
    %v290 = vld [vmem:[#allocation2 + $0x850] sm:$0xff]
    %v291 = vld [vmem:[#allocation2 + $0x858] sm:$0xff]
    %v292 = vld [vmem:[#allocation2 + $0x860] sm:$0xff]
    %v293 = vld [vmem:[#allocation2 + $0x868] sm:$0xff]
    %v294 = vld [vmem:[#allocation2 + $0x870] sm:$0xff]
    %v295 = vld [vmem:[#allocation2 + $0x878] sm:$0xff]
    %v296 = vld [vmem:[#allocation2 + $0x880] sm:$0xff]
    %v297 = vld [vmem:[#allocation2 + $0x888] sm:$0xff]
    %v298 = vld [vmem:[#allocation2 + $0x890] sm:$0xff]
    %v299 = vld [vmem:[#allocation2 + $0x898] sm:$0xff]
    %v300 = vld [vmem:[#allocation2 + $0x8a0] sm:$0xff]
    %v301 = vld [vmem:[#allocation2 + $0x8a8] sm:$0xff]
    %v302 = vld [vmem:[#allocation2 + $0x8b0] sm:$0xff]
    %v303 = vld [vmem:[#allocation2 + $0x8b8] sm:$0xff]
    %v304 = vld [vmem:[#allocation2 + $0x8c0] sm:$0xff]
    %v305 = vld [vmem:[#allocation2 + $0x8c8] sm:$0xff]
    %v306 = vld [vmem:[#allocation2 + $0x8d0] sm:$0xff]
    %v307 = vld [vmem:[#allocation2 + $0x8d8] sm:$0xff]
    %v308 = vld [vmem:[#allocation2 + $0x8e0] sm:$0xff]
    %v309 = vld [vmem:[#allocation2 + $0x8e8] sm:$0xff]
    %v310 = vld [vmem:[#allocation2 + $0x8f0] sm:$0xff]
    %v311 = vld [vmem:[#allocation2 + $0x8f8] sm:$0xff]
    %v312 = vld [vmem:[#allocation2 + $0x900] sm:$0xff]
    %v313 = vld [vmem:[#allocation2 + $0x908] sm:$0xff]
    %v314 = vld [vmem:[#allocation2 + $0x910] sm:$0xff]
    %v315 = vld [vmem:[#allocation2 + $0x918] sm:$0xff]
    %v316 = vld [vmem:[#allocation2 + $0x920] sm:$0xff]
    %v317 = vld [vmem:[#allocation2 + $0x928] sm:$0xff]
    %v318 = vld [vmem:[#allocation2 + $0x930] sm:$0xff]
    %v319 = vld [vmem:[#allocation2 + $0x938] sm:$0xff]
    %v320 = vld [vmem:[#allocation2 + $0x940] sm:$0xff]
    %v321 = vld [vmem:[#allocation2 + $0x948] sm:$0xff]
    %v322 = vld [vmem:[#allocation2 + $0x950] sm:$0xff]
    %v323 = vld [vmem:[#allocation2 + $0x958] sm:$0xff]
    %v324 = vld [vmem:[#allocation2 + $0x960] sm:$0xff]
    %v325 = vld [vmem:[#allocation2 + $0x968] sm:$0xff]
    %v326 = vld [vmem:[#allocation2 + $0x970] sm:$0xff]
    %v327 = vld [vmem:[#allocation2 + $0x978] sm:$0xff]
    %v328 = vld [vmem:[#allocation2 + $0x980] sm:$0xff]
    %v329 = vld [vmem:[#allocation2 + $0x988] sm:$0xff]
    %v330 = vld [vmem:[#allocation2 + $0x990] sm:$0xff]
    %v331 = vld [vmem:[#allocation2 + $0x998] sm:$0xff]
    %v332 = vld [vmem:[#allocation2 + $0x9a0] sm:$0xff]
    %v333 = vld [vmem:[#allocation2 + $0x9a8] sm:$0xff]
    %v334 = vld [vmem:[#allocation2 + $0x9b0] sm:$0xff]
    %v335 = vld [vmem:[#allocation2 + $0x9b8] sm:$0xff]
    %v336 = vld [vmem:[#allocation2 + $0x9c0] sm:$0xff]
    %v337 = vld [vmem:[#allocation2 + $0x9c8] sm:$0xff]
    %v338 = vld [vmem:[#allocation2 + $0x9d0] sm:$0xff]
    %v339 = vld [vmem:[#allocation2 + $0x9d8] sm:$0xff]
    %v340 = vld [vmem:[#allocation2 + $0x9e0] sm:$0xff]
    %v341 = vld [vmem:[#allocation2 + $0x9e8] sm:$0xff]
    %v342 = vld [vmem:[#allocation2 + $0x9f0] sm:$0xff]
    %v343 = vld [vmem:[#allocation2 + $0x9f8] sm:$0xff]
    %v344 = vld [vmem:[#allocation2 + $0xa00] sm:$0xff]
    %v345 = vld [vmem:[#allocation2 + $0xa08] sm:$0xff]
    %v346 = vld [vmem:[#allocation2 + $0xa10] sm:$0xff]
    %v347 = vld [vmem:[#allocation2 + $0xa18] sm:$0xff]
    %v348 = vld [vmem:[#allocation2 + $0xa20] sm:$0xff]
    %v349 = vld [vmem:[#allocation2 + $0xa28] sm:$0xff]
    %v350 = vld [vmem:[#allocation2 + $0xa30] sm:$0xff]
    %v351 = vld [vmem:[#allocation2 + $0xa38] sm:$0xff]
    %v352 = vld [vmem:[#allocation2 + $0xa40] sm:$0xff]
    %v353 = vld [vmem:[#allocation2 + $0xa48] sm:$0xff]
    %v354 = vld [vmem:[#allocation2 + $0xa50] sm:$0xff]
    %v355 = vld [vmem:[#allocation2 + $0xa58] sm:$0xff]
    %v356 = vld [vmem:[#allocation2 + $0xa60] sm:$0xff]
    %v357 = vld [vmem:[#allocation2 + $0xa68] sm:$0xff]
    %v358 = vld [vmem:[#allocation2 + $0xa70] sm:$0xff]
    %v359 = vld [vmem:[#allocation2 + $0xa78] sm:$0xff]
    %v360 = vld [vmem:[#allocation2 + $0xa80] sm:$0xff]
    %v361 = vld [vmem:[#allocation2 + $0xa88] sm:$0xff]
    %v362 = vld [vmem:[#allocation2 + $0xa90] sm:$0xff]
    %v363 = vld [vmem:[#allocation2 + $0xa98] sm:$0xff]
    %v364 = vld [vmem:[#allocation2 + $0xaa0] sm:$0xff]
    %v365 = vld [vmem:[#allocation2 + $0xaa8] sm:$0xff]
    %v366 = vld [vmem:[#allocation2 + $0xab0] sm:$0xff]
    %v367 = vld [vmem:[#allocation2 + $0xab8] sm:$0xff]
    %v368 = vld [vmem:[#allocation2 + $0xac0] sm:$0xff]
    %v369 = vld [vmem:[#allocation2 + $0xac8] sm:$0xff]
    %v370 = vld [vmem:[#allocation2 + $0xad0] sm:$0xff]
    %v371 = vld [vmem:[#allocation2 + $0xad8] sm:$0xff]
    %v372 = vld [vmem:[#allocation2 + $0xae0] sm:$0xff]
    %v373 = vld [vmem:[#allocation2 + $0xae8] sm:$0xff]
    %v374 = vld [vmem:[#allocation2 + $0xaf0] sm:$0xff]
    %v375 = vld [vmem:[#allocation2 + $0xaf8] sm:$0xff]
    %v376 = vld [vmem:[#allocation2 + $0xb00] sm:$0xff]
    %v377 = vld [vmem:[#allocation2 + $0xb08] sm:$0xff]
    %v378 = vld [vmem:[#allocation2 + $0xb10] sm:$0xff]
    %v379 = vld [vmem:[#allocation2 + $0xb18] sm:$0xff]
    %v380 = vld [vmem:[#allocation2 + $0xb20] sm:$0xff]
    %v381 = vld [vmem:[#allocation2 + $0xb28] sm:$0xff]
    %v382 = vld [vmem:[#allocation2 + $0xb30] sm:$0xff]
    %v383 = vld [vmem:[#allocation2 + $0xb38] sm:$0xff]
    %v384 = vld [vmem:[#allocation2 + $0xb40] sm:$0xff]
    %v385 = vld [vmem:[#allocation2 + $0xb48] sm:$0xff]
    %v386 = vld [vmem:[#allocation2 + $0xb50] sm:$0xff]
    %v387 = vld [vmem:[#allocation2 + $0xb58] sm:$0xff]
    %v388 = vld [vmem:[#allocation2 + $0xb60] sm:$0xff]
    %v389 = vld [vmem:[#allocation2 + $0xb68] sm:$0xff]
    %v390 = vld [vmem:[#allocation2 + $0xb70] sm:$0xff]
    %v391 = vld [vmem:[#allocation2 + $0xb78] sm:$0xff]
    %v392 = vld [vmem:[#allocation2 + $0xb80] sm:$0xff]
    %v393 = vld [vmem:[#allocation2 + $0xb88] sm:$0xff]
    %v394 = vld [vmem:[#allocation2 + $0xb90] sm:$0xff]
    %v395 = vld [vmem:[#allocation2 + $0xb98] sm:$0xff]
    %v396 = vld [vmem:[#allocation2 + $0xba0] sm:$0xff]
    %v397 = vld [vmem:[#allocation2 + $0xba8] sm:$0xff]
    %v398 = vld [vmem:[#allocation2 + $0xbb0] sm:$0xff]
    %v399 = vld [vmem:[#allocation2 + $0xbb8] sm:$0xff]
    %v400 = vld [vmem:[#allocation2 + $0xbc0] sm:$0xff]
    %v401 = vld [vmem:[#allocation2 + $0xbc8] sm:$0xff]
    %v402 = vld [vmem:[#allocation2 + $0xbd0] sm:$0xff]
    %v403 = vld [vmem:[#allocation2 + $0xbd8] sm:$0xff]
    %v404 = vld [vmem:[#allocation2 + $0xbe0] sm:$0xff]
    %v405 = vld [vmem:[#allocation2 + $0xbe8] sm:$0xff]
    %v406 = vld [vmem:[#allocation2 + $0xbf0] sm:$0xff]
    %v407 = vld [vmem:[#allocation2 + $0xbf8] sm:$0xff]
    %v408 = vld [vmem:[#allocation2 + $0xc00] sm:$0xff]
    %v409 = vld [vmem:[#allocation2 + $0xc08] sm:$0xff]
    %v410 = vld [vmem:[#allocation2 + $0xc10] sm:$0xff]
    %v411 = vld [vmem:[#allocation2 + $0xc18] sm:$0xff]
    %v412 = vld [vmem:[#allocation2 + $0xc20] sm:$0xff]
    %v413 = vld [vmem:[#allocation2 + $0xc28] sm:$0xff]
    %v414 = vld [vmem:[#allocation2 + $0xc30] sm:$0xff]
    %v415 = vld [vmem:[#allocation2 + $0xc38] sm:$0xff]
    %v416 = vld [vmem:[#allocation2 + $0xc40] sm:$0xff]
    %v417 = vld [vmem:[#allocation2 + $0xc48] sm:$0xff]
    %v418 = vld [vmem:[#allocation2 + $0xc50] sm:$0xff]
    %v419 = vld [vmem:[#allocation2 + $0xc58] sm:$0xff]
    %v420 = vld [vmem:[#allocation2 + $0xc60] sm:$0xff]
    %v421 = vld [vmem:[#allocation2 + $0xc68] sm:$0xff]
    %v422 = vld [vmem:[#allocation2 + $0xc70] sm:$0xff]
    %v423 = vld [vmem:[#allocation2 + $0xc78] sm:$0xff]
    %v424 = vld [vmem:[#allocation2 + $0xc80] sm:$0xff]
    %v425 = vld [vmem:[#allocation2 + $0xc88] sm:$0xff]
    %v426 = vld [vmem:[#allocation2 + $0xc90] sm:$0xff]
    %v427 = vld [vmem:[#allocation2 + $0xc98] sm:$0xff]
    %v428 = vld [vmem:[#allocation2 + $0xca0] sm:$0xff]
    %v429 = vld [vmem:[#allocation2 + $0xca8] sm:$0xff]
    %v430 = vld [vmem:[#allocation2 + $0xcb0] sm:$0xff]
    %v431 = vld [vmem:[#allocation2 + $0xcb8] sm:$0xff]
    %v432 = vld [vmem:[#allocation2 + $0xcc0] sm:$0xff]
    %v433 = vld [vmem:[#allocation2 + $0xcc8] sm:$0xff]
    %v434 = vld [vmem:[#allocation2 + $0xcd0] sm:$0xff]
    %v435 = vld [vmem:[#allocation2 + $0xcd8] sm:$0xff]
    %v436 = vld [vmem:[#allocation2 + $0xce0] sm:$0xff]
    %v437 = vld [vmem:[#allocation2 + $0xce8] sm:$0xff]
    %v438 = vld [vmem:[#allocation2 + $0xcf0] sm:$0xff]
    %v439 = vld [vmem:[#allocation2 + $0xcf8] sm:$0xff]
    %v440 = vld [vmem:[#allocation2 + $0xd00] sm:$0xff]
    %v441 = vld [vmem:[#allocation2 + $0xd08] sm:$0xff]
    %v442 = vld [vmem:[#allocation2 + $0xd10] sm:$0xff]
    %v443 = vld [vmem:[#allocation2 + $0xd18] sm:$0xff]
    %v444 = vld [vmem:[#allocation2 + $0xd20] sm:$0xff]
    %v445 = vld [vmem:[#allocation2 + $0xd28] sm:$0xff]
    %v446 = vld [vmem:[#allocation2 + $0xd30] sm:$0xff]
    %v447 = vld [vmem:[#allocation2 + $0xd38] sm:$0xff]
    %v448 = vld [vmem:[#allocation2 + $0xd40] sm:$0xff]
    %v449 = vld [vmem:[#allocation2 + $0xd48] sm:$0xff]
    %v450 = vld [vmem:[#allocation2 + $0xd50] sm:$0xff]
    %v451 = vld [vmem:[#allocation2 + $0xd58] sm:$0xff]
    %v452 = vld [vmem:[#allocation2 + $0xd60] sm:$0xff]
    %v453 = vld [vmem:[#allocation2 + $0xd68] sm:$0xff]
    %v454 = vld [vmem:[#allocation2 + $0xd70] sm:$0xff]
    %v455 = vld [vmem:[#allocation2 + $0xd78] sm:$0xff]
    %v456 = vld [vmem:[#allocation2 + $0xd80] sm:$0xff]
    %v457 = vld [vmem:[#allocation2 + $0xd88] sm:$0xff]
    %v458 = vld [vmem:[#allocation2 + $0xd90] sm:$0xff]
    %v459 = vld [vmem:[#allocation2 + $0xd98] sm:$0xff]
    %v460 = vld [vmem:[#allocation2 + $0xda0] sm:$0xff]
    %v461 = vld [vmem:[#allocation2 + $0xda8] sm:$0xff]
    %v462 = vld [vmem:[#allocation2 + $0xdb0] sm:$0xff]
    %v463 = vld [vmem:[#allocation2 + $0xdb8] sm:$0xff]
    %v464 = vld [vmem:[#allocation2 + $0xdc0] sm:$0xff]
    %v465 = vld [vmem:[#allocation2 + $0xdc8] sm:$0xff]
    %v466 = vld [vmem:[#allocation2 + $0xdd0] sm:$0xff]
    %v467 = vld [vmem:[#allocation2 + $0xdd8] sm:$0xff]
    %v468 = vld [vmem:[#allocation2 + $0xde0] sm:$0xff]
    %v469 = vld [vmem:[#allocation2 + $0xde8] sm:$0xff]
    %v470 = vld [vmem:[#allocation2 + $0xdf0] sm:$0xff]
    %v471 = vld [vmem:[#allocation2 + $0xdf8] sm:$0xff]
    %v472 = vld [vmem:[#allocation2 + $0xe00] sm:$0xff]
    %v473 = vld [vmem:[#allocation2 + $0xe08] sm:$0xff]
    %v474 = vld [vmem:[#allocation2 + $0xe10] sm:$0xff]
    %v475 = vld [vmem:[#allocation2 + $0xe18] sm:$0xff]
    %v476 = vld [vmem:[#allocation2 + $0xe20] sm:$0xff]
    %v477 = vld [vmem:[#allocation2 + $0xe28] sm:$0xff]
    %v478 = vld [vmem:[#allocation2 + $0xe30] sm:$0xff]
    %v479 = vld [vmem:[#allocation2 + $0xe38] sm:$0xff]
    %v480 = vld [vmem:[#allocation2 + $0xe40] sm:$0xff]
    %v481 = vld [vmem:[#allocation2 + $0xe48] sm:$0xff]
    %v482 = vld [vmem:[#allocation2 + $0xe50] sm:$0xff]
    %v483 = vld [vmem:[#allocation2 + $0xe58] sm:$0xff]
    %v484 = vld [vmem:[#allocation2 + $0xe60] sm:$0xff]
    %v485 = vld [vmem:[#allocation2 + $0xe68] sm:$0xff]
    %v486 = vld [vmem:[#allocation2 + $0xe70] sm:$0xff]
    %v487 = vld [vmem:[#allocation2 + $0xe78] sm:$0xff]
    %v488 = vld [vmem:[#allocation2 + $0xe80] sm:$0xff]
    %v489 = vld [vmem:[#allocation2 + $0xe88] sm:$0xff]
    %v490 = vld [vmem:[#allocation2 + $0xe90] sm:$0xff]
    %v491 = vld [vmem:[#allocation2 + $0xe98] sm:$0xff]
    %v492 = vld [vmem:[#allocation2 + $0xea0] sm:$0xff]
    %v493 = vld [vmem:[#allocation2 + $0xea8] sm:$0xff]
    %v494 = vld [vmem:[#allocation2 + $0xeb0] sm:$0xff]
    %v495 = vld [vmem:[#allocation2 + $0xeb8] sm:$0xff]
    %v496 = vld [vmem:[#allocation2 + $0xec0] sm:$0xff]
    %v497 = vld [vmem:[#allocation2 + $0xec8] sm:$0xff]
    %v498 = vld [vmem:[#allocation2 + $0xed0] sm:$0xff]
    %v499 = vld [vmem:[#allocation2 + $0xed8] sm:$0xff]
    %v500 = vld [vmem:[#allocation2 + $0xee0] sm:$0xff]
    %v501 = vld [vmem:[#allocation2 + $0xee8] sm:$0xff]
    %v502 = vld [vmem:[#allocation2 + $0xef0] sm:$0xff]
    %v503 = vld [vmem:[#allocation2 + $0xef8] sm:$0xff]
    %v504 = vld [vmem:[#allocation2 + $0xf00] sm:$0xff]
    %v505 = vld [vmem:[#allocation2 + $0xf08] sm:$0xff]
    %v506 = vld [vmem:[#allocation2 + $0xf10] sm:$0xff]
    %v507 = vld [vmem:[#allocation2 + $0xf18] sm:$0xff]
    %v508 = vld [vmem:[#allocation2 + $0xf20] sm:$0xff]
    %v509 = vld [vmem:[#allocation2 + $0xf28] sm:$0xff]
    %v510 = vld [vmem:[#allocation2 + $0xf30] sm:$0xff]
    %v511 = vld [vmem:[#allocation2 + $0xf38] sm:$0xff]
    %v512 = vld [vmem:[#allocation2 + $0xf40] sm:$0xff]
    %v513 = vld [vmem:[#allocation2 + $0xf48] sm:$0xff]
    %v514 = vld [vmem:[#allocation2 + $0xf50] sm:$0xff]
    %v515 = vld [vmem:[#allocation2 + $0xf58] sm:$0xff]
    %v516 = vld [vmem:[#allocation2 + $0xf60] sm:$0xff]
    %v517 = vld [vmem:[#allocation2 + $0xf68] sm:$0xff]
    %v518 = vld [vmem:[#allocation2 + $0xf70] sm:$0xff]
    %v519 = vld [vmem:[#allocation2 + $0xf78] sm:$0xff]
    %v520 = vld [vmem:[#allocation2 + $0xf80] sm:$0xff]
    %v521 = vld [vmem:[#allocation2 + $0xf88] sm:$0xff]
    %v522 = vld [vmem:[#allocation2 + $0xf90] sm:$0xff]
    %v523 = vld [vmem:[#allocation2 + $0xf98] sm:$0xff]
    %v524 = vld [vmem:[#allocation2 + $0xfa0] sm:$0xff]
    %v525 = vld [vmem:[#allocation2 + $0xfa8] sm:$0xff]
    %v526 = vld [vmem:[#allocation2 + $0xfb0] sm:$0xff]
    %v527 = vld [vmem:[#allocation2 + $0xfb8] sm:$0xff]
    %v528 = vld [vmem:[#allocation2 + $0xfc0] sm:$0xff]
    %v529 = vld [vmem:[#allocation2 + $0xfc8] sm:$0xff]
    %v530 = vld [vmem:[#allocation2 + $0xfd0] sm:$0xff]
    %v531 = vld [vmem:[#allocation2 + $0xfd8] sm:$0xff]
    %v532 = vld [vmem:[#allocation2 + $0xfe0] sm:$0xff]
    %v533 = vld [vmem:[#allocation2 + $0xfe8] sm:$0xff]
    %v534 = vld [vmem:[#allocation2 + $0xff0] sm:$0xff]
    %v535 = vld [vmem:[#allocation2 + $0xff8] sm:$0xff]
    %v536 = vld [vmem:[%s0] sm:$0xff]
    %538 = vset.pattern.permute.xlu0 0
    %539 = vperm.xlu0 %538, %v536
    %v540 = vpop.permute.xlu0 %539
    %v542 = vmul.f32 %v24, %v540
    %v543 = vmul.f32 %v25, %v540
    %v544 = vmul.f32 %v26, %v540
    %v545 = vmul.f32 %v27, %v540
    %v546 = vmul.f32 %v28, %v540
    %v547 = vmul.f32 %v29, %v540
    %v548 = vmul.f32 %v30, %v540
    %v549 = vmul.f32 %v31, %v540
    %v550 = vmul.f32 %v32, %v540
    %v551 = vmul.f32 %v33, %v540
    %v552 = vmul.f32 %v34, %v540
    %v553 = vmul.f32 %v35, %v540
    %v554 = vmul.f32 %v36, %v540
    %v555 = vmul.f32 %v37, %v540
    %v556 = vmul.f32 %v38, %v540
    %v557 = vmul.f32 %v39, %v540
    %v558 = vmul.f32 %v40, %v540
    %v559 = vmul.f32 %v41, %v540
    %v560 = vmul.f32 %v42, %v540
    %v561 = vmul.f32 %v43, %v540
    %v562 = vmul.f32 %v44, %v540
    %v563 = vmul.f32 %v45, %v540
    %v564 = vmul.f32 %v46, %v540
    %v565 = vmul.f32 %v47, %v540
    %v566 = vmul.f32 %v48, %v540
    %v567 = vmul.f32 %v49, %v540
    %v568 = vmul.f32 %v50, %v540
    %v569 = vmul.f32 %v51, %v540
    %v570 = vmul.f32 %v52, %v540
    %v571 = vmul.f32 %v53, %v540
    %v572 = vmul.f32 %v54, %v540
    %v573 = vmul.f32 %v55, %v540
    %v574 = vmul.f32 %v56, %v540
    %v575 = vmul.f32 %v57, %v540
    %v576 = vmul.f32 %v58, %v540
    %v577 = vmul.f32 %v59, %v540
    %v578 = vmul.f32 %v60, %v540
    %v579 = vmul.f32 %v61, %v540
    %v580 = vmul.f32 %v62, %v540
    %v581 = vmul.f32 %v63, %v540
    %v582 = vmul.f32 %v64, %v540
    %v583 = vmul.f32 %v65, %v540
    %v584 = vmul.f32 %v66, %v540
    %v585 = vmul.f32 %v67, %v540
    %v586 = vmul.f32 %v68, %v540
    %v587 = vmul.f32 %v69, %v540
    %v588 = vmul.f32 %v70, %v540
    %v589 = vmul.f32 %v71, %v540
    %v590 = vmul.f32 %v72, %v540
    %v591 = vmul.f32 %v73, %v540
    %v592 = vmul.f32 %v74, %v540
    %v593 = vmul.f32 %v75, %v540
    %v594 = vmul.f32 %v76, %v540
    %v595 = vmul.f32 %v77, %v540
    %v596 = vmul.f32 %v78, %v540
    %v597 = vmul.f32 %v79, %v540
    %v598 = vmul.f32 %v80, %v540
    %v599 = vmul.f32 %v81, %v540
    %v600 = vmul.f32 %v82, %v540
    %v601 = vmul.f32 %v83, %v540
    %v602 = vmul.f32 %v84, %v540
    %v603 = vmul.f32 %v85, %v540
    %v604 = vmul.f32 %v86, %v540
    %v605 = vmul.f32 %v87, %v540
    %v606 = vmul.f32 %v88, %v540
    %v607 = vmul.f32 %v89, %v540
    %v608 = vmul.f32 %v90, %v540
    %v609 = vmul.f32 %v91, %v540
    %v610 = vmul.f32 %v92, %v540
    %v611 = vmul.f32 %v93, %v540
    %v612 = vmul.f32 %v94, %v540
    %v613 = vmul.f32 %v95, %v540
    %v614 = vmul.f32 %v96, %v540
    %v615 = vmul.f32 %v97, %v540
    %v616 = vmul.f32 %v98, %v540
    %v617 = vmul.f32 %v99, %v540
    %v618 = vmul.f32 %v100, %v540
    %v619 = vmul.f32 %v101, %v540
    %v620 = vmul.f32 %v102, %v540
    %v621 = vmul.f32 %v103, %v540
    %v622 = vmul.f32 %v104, %v540
    %v623 = vmul.f32 %v105, %v540
    %v624 = vmul.f32 %v106, %v540
    %v625 = vmul.f32 %v107, %v540
    %v626 = vmul.f32 %v108, %v540
    %v627 = vmul.f32 %v109, %v540
    %v628 = vmul.f32 %v110, %v540
    %v629 = vmul.f32 %v111, %v540
    %v630 = vmul.f32 %v112, %v540
    %v631 = vmul.f32 %v113, %v540
    %v632 = vmul.f32 %v114, %v540
    %v633 = vmul.f32 %v115, %v540
    %v634 = vmul.f32 %v116, %v540
    %v635 = vmul.f32 %v117, %v540
    %v636 = vmul.f32 %v118, %v540
    %v637 = vmul.f32 %v119, %v540
    %v638 = vmul.f32 %v120, %v540
    %v639 = vmul.f32 %v121, %v540
    %v640 = vmul.f32 %v122, %v540
    %v641 = vmul.f32 %v123, %v540
    %v642 = vmul.f32 %v124, %v540
    %v643 = vmul.f32 %v125, %v540
    %v644 = vmul.f32 %v126, %v540
    %v645 = vmul.f32 %v127, %v540
    %v646 = vmul.f32 %v128, %v540
    %v647 = vmul.f32 %v129, %v540
    %v648 = vmul.f32 %v130, %v540
    %v649 = vmul.f32 %v131, %v540
    %v650 = vmul.f32 %v132, %v540
    %v651 = vmul.f32 %v133, %v540
    %v652 = vmul.f32 %v134, %v540
    %v653 = vmul.f32 %v135, %v540
    %v654 = vmul.f32 %v136, %v540
    %v655 = vmul.f32 %v137, %v540
    %v656 = vmul.f32 %v138, %v540
    %v657 = vmul.f32 %v139, %v540
    %v658 = vmul.f32 %v140, %v540
    %v659 = vmul.f32 %v141, %v540
    %v660 = vmul.f32 %v142, %v540
    %v661 = vmul.f32 %v143, %v540
    %v662 = vmul.f32 %v144, %v540
    %v663 = vmul.f32 %v145, %v540
    %v664 = vmul.f32 %v146, %v540
    %v665 = vmul.f32 %v147, %v540
    %v666 = vmul.f32 %v148, %v540
    %v667 = vmul.f32 %v149, %v540
    %v668 = vmul.f32 %v150, %v540
    %v669 = vmul.f32 %v151, %v540
    %v670 = vmul.f32 %v152, %v540
    %v671 = vmul.f32 %v153, %v540
    %v672 = vmul.f32 %v154, %v540
    %v673 = vmul.f32 %v155, %v540
    %v674 = vmul.f32 %v156, %v540
    %v675 = vmul.f32 %v157, %v540
    %v676 = vmul.f32 %v158, %v540
    %v677 = vmul.f32 %v159, %v540
    %v678 = vmul.f32 %v160, %v540
    %v679 = vmul.f32 %v161, %v540
    %v680 = vmul.f32 %v162, %v540
    %v681 = vmul.f32 %v163, %v540
    %v682 = vmul.f32 %v164, %v540
    %v683 = vmul.f32 %v165, %v540
    %v684 = vmul.f32 %v166, %v540
    %v685 = vmul.f32 %v167, %v540
    %v686 = vmul.f32 %v168, %v540
    %v687 = vmul.f32 %v169, %v540
    %v688 = vmul.f32 %v170, %v540
    %v689 = vmul.f32 %v171, %v540
    %v690 = vmul.f32 %v172, %v540
    %v691 = vmul.f32 %v173, %v540
    %v692 = vmul.f32 %v174, %v540
    %v693 = vmul.f32 %v175, %v540
    %v694 = vmul.f32 %v176, %v540
    %v695 = vmul.f32 %v177, %v540
    %v696 = vmul.f32 %v178, %v540
    %v697 = vmul.f32 %v179, %v540
    %v698 = vmul.f32 %v180, %v540
    %v699 = vmul.f32 %v181, %v540
    %v700 = vmul.f32 %v182, %v540
    %v701 = vmul.f32 %v183, %v540
    %v702 = vmul.f32 %v184, %v540
    %v703 = vmul.f32 %v185, %v540
    %v704 = vmul.f32 %v186, %v540
    %v705 = vmul.f32 %v187, %v540
    %v706 = vmul.f32 %v188, %v540
    %v707 = vmul.f32 %v189, %v540
    %v708 = vmul.f32 %v190, %v540
    %v709 = vmul.f32 %v191, %v540
    %v710 = vmul.f32 %v192, %v540
    %v711 = vmul.f32 %v193, %v540
    %v712 = vmul.f32 %v194, %v540
    %v713 = vmul.f32 %v195, %v540
    %v714 = vmul.f32 %v196, %v540
    %v715 = vmul.f32 %v197, %v540
    %v716 = vmul.f32 %v198, %v540
    %v717 = vmul.f32 %v199, %v540
    %v718 = vmul.f32 %v200, %v540
    %v719 = vmul.f32 %v201, %v540
    %v720 = vmul.f32 %v202, %v540
    %v721 = vmul.f32 %v203, %v540
    %v722 = vmul.f32 %v204, %v540
    %v723 = vmul.f32 %v205, %v540
    %v724 = vmul.f32 %v206, %v540
    %v725 = vmul.f32 %v207, %v540
    %v726 = vmul.f32 %v208, %v540
    %v727 = vmul.f32 %v209, %v540
    %v728 = vmul.f32 %v210, %v540
    %v729 = vmul.f32 %v211, %v540
    %v730 = vmul.f32 %v212, %v540
    %v731 = vmul.f32 %v213, %v540
    %v732 = vmul.f32 %v214, %v540
    %v733 = vmul.f32 %v215, %v540
    %v734 = vmul.f32 %v216, %v540
    %v735 = vmul.f32 %v217, %v540
    %v736 = vmul.f32 %v218, %v540
    %v737 = vmul.f32 %v219, %v540
    %v738 = vmul.f32 %v220, %v540
    %v739 = vmul.f32 %v221, %v540
    %v740 = vmul.f32 %v222, %v540
    %v741 = vmul.f32 %v223, %v540
    %v742 = vmul.f32 %v224, %v540
    %v743 = vmul.f32 %v225, %v540
    %v744 = vmul.f32 %v226, %v540
    %v745 = vmul.f32 %v227, %v540
    %v746 = vmul.f32 %v228, %v540
    %v747 = vmul.f32 %v229, %v540
    %v748 = vmul.f32 %v230, %v540
    %v749 = vmul.f32 %v231, %v540
    %v750 = vmul.f32 %v232, %v540
    %v751 = vmul.f32 %v233, %v540
    %v752 = vmul.f32 %v234, %v540
    %v753 = vmul.f32 %v235, %v540
    %v754 = vmul.f32 %v236, %v540
    %v755 = vmul.f32 %v237, %v540
    %v756 = vmul.f32 %v238, %v540
    %v757 = vmul.f32 %v239, %v540
    %v758 = vmul.f32 %v240, %v540
    %v759 = vmul.f32 %v241, %v540
    %v760 = vmul.f32 %v242, %v540
    %v761 = vmul.f32 %v243, %v540
    %v762 = vmul.f32 %v244, %v540
    %v763 = vmul.f32 %v245, %v540
    %v764 = vmul.f32 %v246, %v540
    %v765 = vmul.f32 %v247, %v540
    %v766 = vmul.f32 %v248, %v540
    %v767 = vmul.f32 %v249, %v540
    %v768 = vmul.f32 %v250, %v540
    %v769 = vmul.f32 %v251, %v540
    %v770 = vmul.f32 %v252, %v540
    %v771 = vmul.f32 %v253, %v540
    %v772 = vmul.f32 %v254, %v540
    %v773 = vmul.f32 %v255, %v540
    %v774 = vmul.f32 %v256, %v540
    %v775 = vmul.f32 %v257, %v540
    %v776 = vmul.f32 %v258, %v540
    %v777 = vmul.f32 %v259, %v540
    %v778 = vmul.f32 %v260, %v540
    %v779 = vmul.f32 %v261, %v540
    %v780 = vmul.f32 %v262, %v540
    %v781 = vmul.f32 %v263, %v540
    %v782 = vmul.f32 %v264, %v540
    %v783 = vmul.f32 %v265, %v540
    %v784 = vmul.f32 %v266, %v540
    %v785 = vmul.f32 %v267, %v540
    %v786 = vmul.f32 %v268, %v540
    %v787 = vmul.f32 %v269, %v540
    %v788 = vmul.f32 %v270, %v540
    %v789 = vmul.f32 %v271, %v540
    %v790 = vmul.f32 %v272, %v540
    %v791 = vmul.f32 %v273, %v540
    %v792 = vmul.f32 %v274, %v540
    %v793 = vmul.f32 %v275, %v540
    %v794 = vmul.f32 %v276, %v540
    %v795 = vmul.f32 %v277, %v540
    %v796 = vmul.f32 %v278, %v540
    %v797 = vmul.f32 %v279, %v540
    %v798 = vmul.f32 %v280, %v540
    %v799 = vmul.f32 %v281, %v540
    %v800 = vmul.f32 %v282, %v540
    %v801 = vmul.f32 %v283, %v540
    %v802 = vmul.f32 %v284, %v540
    %v803 = vmul.f32 %v285, %v540
    %v804 = vmul.f32 %v286, %v540
    %v805 = vmul.f32 %v287, %v540
    %v806 = vmul.f32 %v288, %v540
    %v807 = vmul.f32 %v289, %v540
    %v808 = vmul.f32 %v290, %v540
    %v809 = vmul.f32 %v291, %v540
    %v810 = vmul.f32 %v292, %v540
    %v811 = vmul.f32 %v293, %v540
    %v812 = vmul.f32 %v294, %v540
    %v813 = vmul.f32 %v295, %v540
    %v814 = vmul.f32 %v296, %v540
    %v815 = vmul.f32 %v297, %v540
    %v816 = vmul.f32 %v298, %v540
    %v817 = vmul.f32 %v299, %v540
    %v818 = vmul.f32 %v300, %v540
    %v819 = vmul.f32 %v301, %v540
    %v820 = vmul.f32 %v302, %v540
    %v821 = vmul.f32 %v303, %v540
    %v822 = vmul.f32 %v304, %v540
    %v823 = vmul.f32 %v305, %v540
    %v824 = vmul.f32 %v306, %v540
    %v825 = vmul.f32 %v307, %v540
    %v826 = vmul.f32 %v308, %v540
    %v827 = vmul.f32 %v309, %v540
    %v828 = vmul.f32 %v310, %v540
    %v829 = vmul.f32 %v311, %v540
    %v830 = vmul.f32 %v312, %v540
    %v831 = vmul.f32 %v313, %v540
    %v832 = vmul.f32 %v314, %v540
    %v833 = vmul.f32 %v315, %v540
    %v834 = vmul.f32 %v316, %v540
    %v835 = vmul.f32 %v317, %v540
    %v836 = vmul.f32 %v318, %v540
    %v837 = vmul.f32 %v319, %v540
    %v838 = vmul.f32 %v320, %v540
    %v839 = vmul.f32 %v321, %v540
    %v840 = vmul.f32 %v322, %v540
    %v841 = vmul.f32 %v323, %v540
    %v842 = vmul.f32 %v324, %v540
    %v843 = vmul.f32 %v325, %v540
    %v844 = vmul.f32 %v326, %v540
    %v845 = vmul.f32 %v327, %v540
    %v846 = vmul.f32 %v328, %v540
    %v847 = vmul.f32 %v329, %v540
    %v848 = vmul.f32 %v330, %v540
    %v849 = vmul.f32 %v331, %v540
    %v850 = vmul.f32 %v332, %v540
    %v851 = vmul.f32 %v333, %v540
    %v852 = vmul.f32 %v334, %v540
    %v853 = vmul.f32 %v335, %v540
    %v854 = vmul.f32 %v336, %v540
    %v855 = vmul.f32 %v337, %v540
    %v856 = vmul.f32 %v338, %v540
    %v857 = vmul.f32 %v339, %v540
    %v858 = vmul.f32 %v340, %v540
    %v859 = vmul.f32 %v341, %v540
    %v860 = vmul.f32 %v342, %v540
    %v861 = vmul.f32 %v343, %v540
    %v862 = vmul.f32 %v344, %v540
    %v863 = vmul.f32 %v345, %v540
    %v864 = vmul.f32 %v346, %v540
    %v865 = vmul.f32 %v347, %v540
    %v866 = vmul.f32 %v348, %v540
    %v867 = vmul.f32 %v349, %v540
    %v868 = vmul.f32 %v350, %v540
    %v869 = vmul.f32 %v351, %v540
    %v870 = vmul.f32 %v352, %v540
    %v871 = vmul.f32 %v353, %v540
    %v872 = vmul.f32 %v354, %v540
    %v873 = vmul.f32 %v355, %v540
    %v874 = vmul.f32 %v356, %v540
    %v875 = vmul.f32 %v357, %v540
    %v876 = vmul.f32 %v358, %v540
    %v877 = vmul.f32 %v359, %v540
    %v878 = vmul.f32 %v360, %v540
    %v879 = vmul.f32 %v361, %v540
    %v880 = vmul.f32 %v362, %v540
    %v881 = vmul.f32 %v363, %v540
    %v882 = vmul.f32 %v364, %v540
    %v883 = vmul.f32 %v365, %v540
    %v884 = vmul.f32 %v366, %v540
    %v885 = vmul.f32 %v367, %v540
    %v886 = vmul.f32 %v368, %v540
    %v887 = vmul.f32 %v369, %v540
    %v888 = vmul.f32 %v370, %v540
    %v889 = vmul.f32 %v371, %v540
    %v890 = vmul.f32 %v372, %v540
    %v891 = vmul.f32 %v373, %v540
    %v892 = vmul.f32 %v374, %v540
    %v893 = vmul.f32 %v375, %v540
    %v894 = vmul.f32 %v376, %v540
    %v895 = vmul.f32 %v377, %v540
    %v896 = vmul.f32 %v378, %v540
    %v897 = vmul.f32 %v379, %v540
    %v898 = vmul.f32 %v380, %v540
    %v899 = vmul.f32 %v381, %v540
    %v900 = vmul.f32 %v382, %v540
    %v901 = vmul.f32 %v383, %v540
    %v902 = vmul.f32 %v384, %v540
    %v903 = vmul.f32 %v385, %v540
    %v904 = vmul.f32 %v386, %v540
    %v905 = vmul.f32 %v387, %v540
    %v906 = vmul.f32 %v388, %v540
    %v907 = vmul.f32 %v389, %v540
    %v908 = vmul.f32 %v390, %v540
    %v909 = vmul.f32 %v391, %v540
    %v910 = vmul.f32 %v392, %v540
    %v911 = vmul.f32 %v393, %v540
    %v912 = vmul.f32 %v394, %v540
    %v913 = vmul.f32 %v395, %v540
    %v914 = vmul.f32 %v396, %v540
    %v915 = vmul.f32 %v397, %v540
    %v916 = vmul.f32 %v398, %v540
    %v917 = vmul.f32 %v399, %v540
    %v918 = vmul.f32 %v400, %v540
    %v919 = vmul.f32 %v401, %v540
    %v920 = vmul.f32 %v402, %v540
    %v921 = vmul.f32 %v403, %v540
    %v922 = vmul.f32 %v404, %v540
    %v923 = vmul.f32 %v405, %v540
    %v924 = vmul.f32 %v406, %v540
    %v925 = vmul.f32 %v407, %v540
    %v926 = vmul.f32 %v408, %v540
    %v927 = vmul.f32 %v409, %v540
    %v928 = vmul.f32 %v410, %v540
    %v929 = vmul.f32 %v411, %v540
    %v930 = vmul.f32 %v412, %v540
    %v931 = vmul.f32 %v413, %v540
    %v932 = vmul.f32 %v414, %v540
    %v933 = vmul.f32 %v415, %v540
    %v934 = vmul.f32 %v416, %v540
    %v935 = vmul.f32 %v417, %v540
    %v936 = vmul.f32 %v418, %v540
    %v937 = vmul.f32 %v419, %v540
    %v938 = vmul.f32 %v420, %v540
    %v939 = vmul.f32 %v421, %v540
    %v940 = vmul.f32 %v422, %v540
    %v941 = vmul.f32 %v423, %v540
    %v942 = vmul.f32 %v424, %v540
    %v943 = vmul.f32 %v425, %v540
    %v944 = vmul.f32 %v426, %v540
    %v945 = vmul.f32 %v427, %v540
    %v946 = vmul.f32 %v428, %v540
    %v947 = vmul.f32 %v429, %v540
    %v948 = vmul.f32 %v430, %v540
    %v949 = vmul.f32 %v431, %v540
    %v950 = vmul.f32 %v432, %v540
    %v951 = vmul.f32 %v433, %v540
    %v952 = vmul.f32 %v434, %v540
    %v953 = vmul.f32 %v435, %v540
    %v954 = vmul.f32 %v436, %v540
    %v955 = vmul.f32 %v437, %v540
    %v956 = vmul.f32 %v438, %v540
    %v957 = vmul.f32 %v439, %v540
    %v958 = vmul.f32 %v440, %v540
    %v959 = vmul.f32 %v441, %v540
    %v960 = vmul.f32 %v442, %v540
    %v961 = vmul.f32 %v443, %v540
    %v962 = vmul.f32 %v444, %v540
    %v963 = vmul.f32 %v445, %v540
    %v964 = vmul.f32 %v446, %v540
    %v965 = vmul.f32 %v447, %v540
    %v966 = vmul.f32 %v448, %v540
    %v967 = vmul.f32 %v449, %v540
    %v968 = vmul.f32 %v450, %v540
    %v969 = vmul.f32 %v451, %v540
    %v970 = vmul.f32 %v452, %v540
    %v971 = vmul.f32 %v453, %v540
    %v972 = vmul.f32 %v454, %v540
    %v973 = vmul.f32 %v455, %v540
    %v974 = vmul.f32 %v456, %v540
    %v975 = vmul.f32 %v457, %v540
    %v976 = vmul.f32 %v458, %v540
    %v977 = vmul.f32 %v459, %v540
    %v978 = vmul.f32 %v460, %v540
    %v979 = vmul.f32 %v461, %v540
    %v980 = vmul.f32 %v462, %v540
    %v981 = vmul.f32 %v463, %v540
    %v982 = vmul.f32 %v464, %v540
    %v983 = vmul.f32 %v465, %v540
    %v984 = vmul.f32 %v466, %v540
    %v985 = vmul.f32 %v467, %v540
    %v986 = vmul.f32 %v468, %v540
    %v987 = vmul.f32 %v469, %v540
    %v988 = vmul.f32 %v470, %v540
    %v989 = vmul.f32 %v471, %v540
    %v990 = vmul.f32 %v472, %v540
    %v991 = vmul.f32 %v473, %v540
    %v992 = vmul.f32 %v474, %v540
    %v993 = vmul.f32 %v475, %v540
    %v994 = vmul.f32 %v476, %v540
    %v995 = vmul.f32 %v477, %v540
    %v996 = vmul.f32 %v478, %v540
    %v997 = vmul.f32 %v479, %v540
    %v998 = vmul.f32 %v480, %v540
    %v999 = vmul.f32 %v481, %v540
    %v1000 = vmul.f32 %v482, %v540
    %v1001 = vmul.f32 %v483, %v540
    %v1002 = vmul.f32 %v484, %v540
    %v1003 = vmul.f32 %v485, %v540
    %v1004 = vmul.f32 %v486, %v540
    %v1005 = vmul.f32 %v487, %v540
    %v1006 = vmul.f32 %v488, %v540
    %v1007 = vmul.f32 %v489, %v540
    %v1008 = vmul.f32 %v490, %v540
    %v1009 = vmul.f32 %v491, %v540
    %v1010 = vmul.f32 %v492, %v540
    %v1011 = vmul.f32 %v493, %v540
    %v1012 = vmul.f32 %v494, %v540
    %v1013 = vmul.f32 %v495, %v540
    %v1014 = vmul.f32 %v496, %v540
    %v1015 = vmul.f32 %v497, %v540
    %v1016 = vmul.f32 %v498, %v540
    %v1017 = vmul.f32 %v499, %v540
    %v1018 = vmul.f32 %v500, %v540
    %v1019 = vmul.f32 %v501, %v540
    %v1020 = vmul.f32 %v502, %v540
    %v1021 = vmul.f32 %v503, %v540
    %v1022 = vmul.f32 %v504, %v540
    %v1023 = vmul.f32 %v505, %v540
    %v1024 = vmul.f32 %v506, %v540
    %v1025 = vmul.f32 %v507, %v540
    %v1026 = vmul.f32 %v508, %v540
    %v1027 = vmul.f32 %v509, %v540
    %v1028 = vmul.f32 %v510, %v540
    %v1029 = vmul.f32 %v511, %v540
    %v1030 = vmul.f32 %v512, %v540
    %v1031 = vmul.f32 %v513, %v540
    %v1032 = vmul.f32 %v514, %v540
    %v1033 = vmul.f32 %v515, %v540
    %v1034 = vmul.f32 %v516, %v540
    %v1035 = vmul.f32 %v517, %v540
    %v1036 = vmul.f32 %v518, %v540
    %v1037 = vmul.f32 %v519, %v540
    %v1038 = vmul.f32 %v520, %v540
    %v1039 = vmul.f32 %v521, %v540
    %v1040 = vmul.f32 %v522, %v540
    %v1041 = vmul.f32 %v523, %v540
    %v1042 = vmul.f32 %v524, %v540
    %v1043 = vmul.f32 %v525, %v540
    %v1044 = vmul.f32 %v526, %v540
    %v1045 = vmul.f32 %v527, %v540
    %v1046 = vmul.f32 %v528, %v540
    %v1047 = vmul.f32 %v529, %v540
    %v1048 = vmul.f32 %v530, %v540
    %v1049 = vmul.f32 %v531, %v540
    %v1050 = vmul.f32 %v532, %v540
    %v1051 = vmul.f32 %v533, %v540
    %v1052 = vmul.f32 %v534, %v540
    %v1053 = vmul.f32 %v535, %v540
    %1054 = vst [vmem:[#allocation5] sm:$0xff] %v542
    %1055 = vst [vmem:[#allocation5 + $0x8] sm:$0xff] %v543
    %1056 = vst [vmem:[#allocation5 + $0x10] sm:$0xff] %v544
    %1057 = vst [vmem:[#allocation5 + $0x18] sm:$0xff] %v545
    %1058 = vst [vmem:[#allocation5 + $0x20] sm:$0xff] %v546
    %1059 = vst [vmem:[#allocation5 + $0x28] sm:$0xff] %v547
    %1060 = vst [vmem:[#allocation5 + $0x30] sm:$0xff] %v548
    %1061 = vst [vmem:[#allocation5 + $0x38] sm:$0xff] %v549
    %1062 = vst [vmem:[#allocation5 + $0x40] sm:$0xff] %v550
    %1063 = vst [vmem:[#allocation5 + $0x48] sm:$0xff] %v551
    %1064 = vst [vmem:[#allocation5 + $0x50] sm:$0xff] %v552
    %1065 = vst [vmem:[#allocation5 + $0x58] sm:$0xff] %v553
    %1066 = vst [vmem:[#allocation5 + $0x60] sm:$0xff] %v554
    %1067 = vst [vmem:[#allocation5 + $0x68] sm:$0xff] %v555
    %1068 = vst [vmem:[#allocation5 + $0x70] sm:$0xff] %v556
    %1069 = vst [vmem:[#allocation5 + $0x78] sm:$0xff] %v557
    %1070 = vst [vmem:[#allocation5 + $0x80] sm:$0xff] %v558
    %1071 = vst [vmem:[#allocation5 + $0x88] sm:$0xff] %v559
    %1072 = vst [vmem:[#allocation5 + $0x90] sm:$0xff] %v560
    %1073 = vst [vmem:[#allocation5 + $0x98] sm:$0xff] %v561
    %1074 = vst [vmem:[#allocation5 + $0xa0] sm:$0xff] %v562
    %1075 = vst [vmem:[#allocation5 + $0xa8] sm:$0xff] %v563
    %1076 = vst [vmem:[#allocation5 + $0xb0] sm:$0xff] %v564
    %1077 = vst [vmem:[#allocation5 + $0xb8] sm:$0xff] %v565
    %1078 = vst [vmem:[#allocation5 + $0xc0] sm:$0xff] %v566
    %1079 = vst [vmem:[#allocation5 + $0xc8] sm:$0xff] %v567
    %1080 = vst [vmem:[#allocation5 + $0xd0] sm:$0xff] %v568
    %1081 = vst [vmem:[#allocation5 + $0xd8] sm:$0xff] %v569
    %1082 = vst [vmem:[#allocation5 + $0xe0] sm:$0xff] %v570
    %1083 = vst [vmem:[#allocation5 + $0xe8] sm:$0xff] %v571
    %1084 = vst [vmem:[#allocation5 + $0xf0] sm:$0xff] %v572
    %1085 = vst [vmem:[#allocation5 + $0xf8] sm:$0xff] %v573
    %1086 = vst [vmem:[#allocation5 + $0x100] sm:$0xff] %v574
    %1087 = vst [vmem:[#allocation5 + $0x108] sm:$0xff] %v575
    %1088 = vst [vmem:[#allocation5 + $0x110] sm:$0xff] %v576
    %1089 = vst [vmem:[#allocation5 + $0x118] sm:$0xff] %v577
    %1090 = vst [vmem:[#allocation5 + $0x120] sm:$0xff] %v578
    %1091 = vst [vmem:[#allocation5 + $0x128] sm:$0xff] %v579
    %1092 = vst [vmem:[#allocation5 + $0x130] sm:$0xff] %v580
    %1093 = vst [vmem:[#allocation5 + $0x138] sm:$0xff] %v581
    %1094 = vst [vmem:[#allocation5 + $0x140] sm:$0xff] %v582
    %1095 = vst [vmem:[#allocation5 + $0x148] sm:$0xff] %v583
    %1096 = vst [vmem:[#allocation5 + $0x150] sm:$0xff] %v584
    %1097 = vst [vmem:[#allocation5 + $0x158] sm:$0xff] %v585
    %1098 = vst [vmem:[#allocation5 + $0x160] sm:$0xff] %v586
    %1099 = vst [vmem:[#allocation5 + $0x168] sm:$0xff] %v587
    %1100 = vst [vmem:[#allocation5 + $0x170] sm:$0xff] %v588
    %1101 = vst [vmem:[#allocation5 + $0x178] sm:$0xff] %v589
    %1102 = vst [vmem:[#allocation5 + $0x180] sm:$0xff] %v590
    %1103 = vst [vmem:[#allocation5 + $0x188] sm:$0xff] %v591
    %1104 = vst [vmem:[#allocation5 + $0x190] sm:$0xff] %v592
    %1105 = vst [vmem:[#allocation5 + $0x198] sm:$0xff] %v593
    %1106 = vst [vmem:[#allocation5 + $0x1a0] sm:$0xff] %v594
    %1107 = vst [vmem:[#allocation5 + $0x1a8] sm:$0xff] %v595
    %1108 = vst [vmem:[#allocation5 + $0x1b0] sm:$0xff] %v596
    %1109 = vst [vmem:[#allocation5 + $0x1b8] sm:$0xff] %v597
    %1110 = vst [vmem:[#allocation5 + $0x1c0] sm:$0xff] %v598
    %1111 = vst [vmem:[#allocation5 + $0x1c8] sm:$0xff] %v599
    %1112 = vst [vmem:[#allocation5 + $0x1d0] sm:$0xff] %v600
    %1113 = vst [vmem:[#allocation5 + $0x1d8] sm:$0xff] %v601
    %1114 = vst [vmem:[#allocation5 + $0x1e0] sm:$0xff] %v602
    %1115 = vst [vmem:[#allocation5 + $0x1e8] sm:$0xff] %v603
    %1116 = vst [vmem:[#allocation5 + $0x1f0] sm:$0xff] %v604
    %1117 = vst [vmem:[#allocation5 + $0x1f8] sm:$0xff] %v605
    %1118 = vst [vmem:[#allocation5 + $0x200] sm:$0xff] %v606
    %1119 = vst [vmem:[#allocation5 + $0x208] sm:$0xff] %v607
    %1120 = vst [vmem:[#allocation5 + $0x210] sm:$0xff] %v608
    %1121 = vst [vmem:[#allocation5 + $0x218] sm:$0xff] %v609
    %1122 = vst [vmem:[#allocation5 + $0x220] sm:$0xff] %v610
    %1123 = vst [vmem:[#allocation5 + $0x228] sm:$0xff] %v611
    %1124 = vst [vmem:[#allocation5 + $0x230] sm:$0xff] %v612
    %1125 = vst [vmem:[#allocation5 + $0x238] sm:$0xff] %v613
    %1126 = vst [vmem:[#allocation5 + $0x240] sm:$0xff] %v614
    %1127 = vst [vmem:[#allocation5 + $0x248] sm:$0xff] %v615
    %1128 = vst [vmem:[#allocation5 + $0x250] sm:$0xff] %v616
    %1129 = vst [vmem:[#allocation5 + $0x258] sm:$0xff] %v617
    %1130 = vst [vmem:[#allocation5 + $0x260] sm:$0xff] %v618
    %1131 = vst [vmem:[#allocation5 + $0x268] sm:$0xff] %v619
    %1132 = vst [vmem:[#allocation5 + $0x270] sm:$0xff] %v620
    %1133 = vst [vmem:[#allocation5 + $0x278] sm:$0xff] %v621
    %1134 = vst [vmem:[#allocation5 + $0x280] sm:$0xff] %v622
    %1135 = vst [vmem:[#allocation5 + $0x288] sm:$0xff] %v623
    %1136 = vst [vmem:[#allocation5 + $0x290] sm:$0xff] %v624
    %1137 = vst [vmem:[#allocation5 + $0x298] sm:$0xff] %v625
    %1138 = vst [vmem:[#allocation5 + $0x2a0] sm:$0xff] %v626
    %1139 = vst [vmem:[#allocation5 + $0x2a8] sm:$0xff] %v627
    %1140 = vst [vmem:[#allocation5 + $0x2b0] sm:$0xff] %v628
    %1141 = vst [vmem:[#allocation5 + $0x2b8] sm:$0xff] %v629
    %1142 = vst [vmem:[#allocation5 + $0x2c0] sm:$0xff] %v630
    %1143 = vst [vmem:[#allocation5 + $0x2c8] sm:$0xff] %v631
    %1144 = vst [vmem:[#allocation5 + $0x2d0] sm:$0xff] %v632
    %1145 = vst [vmem:[#allocation5 + $0x2d8] sm:$0xff] %v633
    %1146 = vst [vmem:[#allocation5 + $0x2e0] sm:$0xff] %v634
    %1147 = vst [vmem:[#allocation5 + $0x2e8] sm:$0xff] %v635
    %1148 = vst [vmem:[#allocation5 + $0x2f0] sm:$0xff] %v636
    %1149 = vst [vmem:[#allocation5 + $0x2f8] sm:$0xff] %v637
    %1150 = vst [vmem:[#allocation5 + $0x300] sm:$0xff] %v638
    %1151 = vst [vmem:[#allocation5 + $0x308] sm:$0xff] %v639
    %1152 = vst [vmem:[#allocation5 + $0x310] sm:$0xff] %v640
    %1153 = vst [vmem:[#allocation5 + $0x318] sm:$0xff] %v641
    %1154 = vst [vmem:[#allocation5 + $0x320] sm:$0xff] %v642
    %1155 = vst [vmem:[#allocation5 + $0x328] sm:$0xff] %v643
    %1156 = vst [vmem:[#allocation5 + $0x330] sm:$0xff] %v644
    %1157 = vst [vmem:[#allocation5 + $0x338] sm:$0xff] %v645
    %1158 = vst [vmem:[#allocation5 + $0x340] sm:$0xff] %v646
    %1159 = vst [vmem:[#allocation5 + $0x348] sm:$0xff] %v647
    %1160 = vst [vmem:[#allocation5 + $0x350] sm:$0xff] %v648
    %1161 = vst [vmem:[#allocation5 + $0x358] sm:$0xff] %v649
    %1162 = vst [vmem:[#allocation5 + $0x360] sm:$0xff] %v650
    %1163 = vst [vmem:[#allocation5 + $0x368] sm:$0xff] %v651
    %1164 = vst [vmem:[#allocation5 + $0x370] sm:$0xff] %v652
    %1165 = vst [vmem:[#allocation5 + $0x378] sm:$0xff] %v653
    %1166 = vst [vmem:[#allocation5 + $0x380] sm:$0xff] %v654
    %1167 = vst [vmem:[#allocation5 + $0x388] sm:$0xff] %v655
    %1168 = vst [vmem:[#allocation5 + $0x390] sm:$0xff] %v656
    %1169 = vst [vmem:[#allocation5 + $0x398] sm:$0xff] %v657
    %1170 = vst [vmem:[#allocation5 + $0x3a0] sm:$0xff] %v658
    %1171 = vst [vmem:[#allocation5 + $0x3a8] sm:$0xff] %v659
    %1172 = vst [vmem:[#allocation5 + $0x3b0] sm:$0xff] %v660
    %1173 = vst [vmem:[#allocation5 + $0x3b8] sm:$0xff] %v661
    %1174 = vst [vmem:[#allocation5 + $0x3c0] sm:$0xff] %v662
    %1175 = vst [vmem:[#allocation5 + $0x3c8] sm:$0xff] %v663
    %1176 = vst [vmem:[#allocation5 + $0x3d0] sm:$0xff] %v664
    %1177 = vst [vmem:[#allocation5 + $0x3d8] sm:$0xff] %v665
    %1178 = vst [vmem:[#allocation5 + $0x3e0] sm:$0xff] %v666
    %1179 = vst [vmem:[#allocation5 + $0x3e8] sm:$0xff] %v667
    %1180 = vst [vmem:[#allocation5 + $0x3f0] sm:$0xff] %v668
    %1181 = vst [vmem:[#allocation5 + $0x3f8] sm:$0xff] %v669
    %1182 = vst [vmem:[#allocation5 + $0x400] sm:$0xff] %v670
    %1183 = vst [vmem:[#allocation5 + $0x408] sm:$0xff] %v671
    %1184 = vst [vmem:[#allocation5 + $0x410] sm:$0xff] %v672
    %1185 = vst [vmem:[#allocation5 + $0x418] sm:$0xff] %v673
    %1186 = vst [vmem:[#allocation5 + $0x420] sm:$0xff] %v674
    %1187 = vst [vmem:[#allocation5 + $0x428] sm:$0xff] %v675
    %1188 = vst [vmem:[#allocation5 + $0x430] sm:$0xff] %v676
    %1189 = vst [vmem:[#allocation5 + $0x438] sm:$0xff] %v677
    %1190 = vst [vmem:[#allocation5 + $0x440] sm:$0xff] %v678
    %1191 = vst [vmem:[#allocation5 + $0x448] sm:$0xff] %v679
    %1192 = vst [vmem:[#allocation5 + $0x450] sm:$0xff] %v680
    %1193 = vst [vmem:[#allocation5 + $0x458] sm:$0xff] %v681
    %1194 = vst [vmem:[#allocation5 + $0x460] sm:$0xff] %v682
    %1195 = vst [vmem:[#allocation5 + $0x468] sm:$0xff] %v683
    %1196 = vst [vmem:[#allocation5 + $0x470] sm:$0xff] %v684
    %1197 = vst [vmem:[#allocation5 + $0x478] sm:$0xff] %v685
    %1198 = vst [vmem:[#allocation5 + $0x480] sm:$0xff] %v686
    %1199 = vst [vmem:[#allocation5 + $0x488] sm:$0xff] %v687
    %1200 = vst [vmem:[#allocation5 + $0x490] sm:$0xff] %v688
    %1201 = vst [vmem:[#allocation5 + $0x498] sm:$0xff] %v689
    %1202 = vst [vmem:[#allocation5 + $0x4a0] sm:$0xff] %v690
    %1203 = vst [vmem:[#allocation5 + $0x4a8] sm:$0xff] %v691
    %1204 = vst [vmem:[#allocation5 + $0x4b0] sm:$0xff] %v692
    %1205 = vst [vmem:[#allocation5 + $0x4b8] sm:$0xff] %v693
    %1206 = vst [vmem:[#allocation5 + $0x4c0] sm:$0xff] %v694
    %1207 = vst [vmem:[#allocation5 + $0x4c8] sm:$0xff] %v695
    %1208 = vst [vmem:[#allocation5 + $0x4d0] sm:$0xff] %v696
    %1209 = vst [vmem:[#allocation5 + $0x4d8] sm:$0xff] %v697
    %1210 = vst [vmem:[#allocation5 + $0x4e0] sm:$0xff] %v698
    %1211 = vst [vmem:[#allocation5 + $0x4e8] sm:$0xff] %v699
    %1212 = vst [vmem:[#allocation5 + $0x4f0] sm:$0xff] %v700
    %1213 = vst [vmem:[#allocation5 + $0x4f8] sm:$0xff] %v701
    %1214 = vst [vmem:[#allocation5 + $0x500] sm:$0xff] %v702
    %1215 = vst [vmem:[#allocation5 + $0x508] sm:$0xff] %v703
    %1216 = vst [vmem:[#allocation5 + $0x510] sm:$0xff] %v704
    %1217 = vst [vmem:[#allocation5 + $0x518] sm:$0xff] %v705
    %1218 = vst [vmem:[#allocation5 + $0x520] sm:$0xff] %v706
    %1219 = vst [vmem:[#allocation5 + $0x528] sm:$0xff] %v707
    %1220 = vst [vmem:[#allocation5 + $0x530] sm:$0xff] %v708
    %1221 = vst [vmem:[#allocation5 + $0x538] sm:$0xff] %v709
    %1222 = vst [vmem:[#allocation5 + $0x540] sm:$0xff] %v710
    %1223 = vst [vmem:[#allocation5 + $0x548] sm:$0xff] %v711
    %1224 = vst [vmem:[#allocation5 + $0x550] sm:$0xff] %v712
    %1225 = vst [vmem:[#allocation5 + $0x558] sm:$0xff] %v713
    %1226 = vst [vmem:[#allocation5 + $0x560] sm:$0xff] %v714
    %1227 = vst [vmem:[#allocation5 + $0x568] sm:$0xff] %v715
    %1228 = vst [vmem:[#allocation5 + $0x570] sm:$0xff] %v716
    %1229 = vst [vmem:[#allocation5 + $0x578] sm:$0xff] %v717
    %1230 = vst [vmem:[#allocation5 + $0x580] sm:$0xff] %v718
    %1231 = vst [vmem:[#allocation5 + $0x588] sm:$0xff] %v719
    %1232 = vst [vmem:[#allocation5 + $0x590] sm:$0xff] %v720
    %1233 = vst [vmem:[#allocation5 + $0x598] sm:$0xff] %v721
    %1234 = vst [vmem:[#allocation5 + $0x5a0] sm:$0xff] %v722
    %1235 = vst [vmem:[#allocation5 + $0x5a8] sm:$0xff] %v723
    %1236 = vst [vmem:[#allocation5 + $0x5b0] sm:$0xff] %v724
    %1237 = vst [vmem:[#allocation5 + $0x5b8] sm:$0xff] %v725
    %1238 = vst [vmem:[#allocation5 + $0x5c0] sm:$0xff] %v726
    %1239 = vst [vmem:[#allocation5 + $0x5c8] sm:$0xff] %v727
    %1240 = vst [vmem:[#allocation5 + $0x5d0] sm:$0xff] %v728
    %1241 = vst [vmem:[#allocation5 + $0x5d8] sm:$0xff] %v729
    %1242 = vst [vmem:[#allocation5 + $0x5e0] sm:$0xff] %v730
    %1243 = vst [vmem:[#allocation5 + $0x5e8] sm:$0xff] %v731
    %1244 = vst [vmem:[#allocation5 + $0x5f0] sm:$0xff] %v732
    %1245 = vst [vmem:[#allocation5 + $0x5f8] sm:$0xff] %v733
    %1246 = vst [vmem:[#allocation5 + $0x600] sm:$0xff] %v734
    %1247 = vst [vmem:[#allocation5 + $0x608] sm:$0xff] %v735
    %1248 = vst [vmem:[#allocation5 + $0x610] sm:$0xff] %v736
    %1249 = vst [vmem:[#allocation5 + $0x618] sm:$0xff] %v737
    %1250 = vst [vmem:[#allocation5 + $0x620] sm:$0xff] %v738
    %1251 = vst [vmem:[#allocation5 + $0x628] sm:$0xff] %v739
    %1252 = vst [vmem:[#allocation5 + $0x630] sm:$0xff] %v740
    %1253 = vst [vmem:[#allocation5 + $0x638] sm:$0xff] %v741
    %1254 = vst [vmem:[#allocation5 + $0x640] sm:$0xff] %v742
    %1255 = vst [vmem:[#allocation5 + $0x648] sm:$0xff] %v743
    %1256 = vst [vmem:[#allocation5 + $0x650] sm:$0xff] %v744
    %1257 = vst [vmem:[#allocation5 + $0x658] sm:$0xff] %v745
    %1258 = vst [vmem:[#allocation5 + $0x660] sm:$0xff] %v746
    %1259 = vst [vmem:[#allocation5 + $0x668] sm:$0xff] %v747
    %1260 = vst [vmem:[#allocation5 + $0x670] sm:$0xff] %v748
    %1261 = vst [vmem:[#allocation5 + $0x678] sm:$0xff] %v749
    %1262 = vst [vmem:[#allocation5 + $0x680] sm:$0xff] %v750
    %1263 = vst [vmem:[#allocation5 + $0x688] sm:$0xff] %v751
    %1264 = vst [vmem:[#allocation5 + $0x690] sm:$0xff] %v752
    %1265 = vst [vmem:[#allocation5 + $0x698] sm:$0xff] %v753
    %1266 = vst [vmem:[#allocation5 + $0x6a0] sm:$0xff] %v754
    %1267 = vst [vmem:[#allocation5 + $0x6a8] sm:$0xff] %v755
    %1268 = vst [vmem:[#allocation5 + $0x6b0] sm:$0xff] %v756
    %1269 = vst [vmem:[#allocation5 + $0x6b8] sm:$0xff] %v757
    %1270 = vst [vmem:[#allocation5 + $0x6c0] sm:$0xff] %v758
    %1271 = vst [vmem:[#allocation5 + $0x6c8] sm:$0xff] %v759
    %1272 = vst [vmem:[#allocation5 + $0x6d0] sm:$0xff] %v760
    %1273 = vst [vmem:[#allocation5 + $0x6d8] sm:$0xff] %v761
    %1274 = vst [vmem:[#allocation5 + $0x6e0] sm:$0xff] %v762
    %1275 = vst [vmem:[#allocation5 + $0x6e8] sm:$0xff] %v763
    %1276 = vst [vmem:[#allocation5 + $0x6f0] sm:$0xff] %v764
    %1277 = vst [vmem:[#allocation5 + $0x6f8] sm:$0xff] %v765
    %1278 = vst [vmem:[#allocation5 + $0x700] sm:$0xff] %v766
    %1279 = vst [vmem:[#allocation5 + $0x708] sm:$0xff] %v767
    %1280 = vst [vmem:[#allocation5 + $0x710] sm:$0xff] %v768
    %1281 = vst [vmem:[#allocation5 + $0x718] sm:$0xff] %v769
    %1282 = vst [vmem:[#allocation5 + $0x720] sm:$0xff] %v770
    %1283 = vst [vmem:[#allocation5 + $0x728] sm:$0xff] %v771
    %1284 = vst [vmem:[#allocation5 + $0x730] sm:$0xff] %v772
    %1285 = vst [vmem:[#allocation5 + $0x738] sm:$0xff] %v773
    %1286 = vst [vmem:[#allocation5 + $0x740] sm:$0xff] %v774
    %1287 = vst [vmem:[#allocation5 + $0x748] sm:$0xff] %v775
    %1288 = vst [vmem:[#allocation5 + $0x750] sm:$0xff] %v776
    %1289 = vst [vmem:[#allocation5 + $0x758] sm:$0xff] %v777
    %1290 = vst [vmem:[#allocation5 + $0x760] sm:$0xff] %v778
    %1291 = vst [vmem:[#allocation5 + $0x768] sm:$0xff] %v779
    %1292 = vst [vmem:[#allocation5 + $0x770] sm:$0xff] %v780
    %1293 = vst [vmem:[#allocation5 + $0x778] sm:$0xff] %v781
    %1294 = vst [vmem:[#allocation5 + $0x780] sm:$0xff] %v782
    %1295 = vst [vmem:[#allocation5 + $0x788] sm:$0xff] %v783
    %1296 = vst [vmem:[#allocation5 + $0x790] sm:$0xff] %v784
    %1297 = vst [vmem:[#allocation5 + $0x798] sm:$0xff] %v785
    %1298 = vst [vmem:[#allocation5 + $0x7a0] sm:$0xff] %v786
    %1299 = vst [vmem:[#allocation5 + $0x7a8] sm:$0xff] %v787
    %1300 = vst [vmem:[#allocation5 + $0x7b0] sm:$0xff] %v788
    %1301 = vst [vmem:[#allocation5 + $0x7b8] sm:$0xff] %v789
    %1302 = vst [vmem:[#allocation5 + $0x7c0] sm:$0xff] %v790
    %1303 = vst [vmem:[#allocation5 + $0x7c8] sm:$0xff] %v791
    %1304 = vst [vmem:[#allocation5 + $0x7d0] sm:$0xff] %v792
    %1305 = vst [vmem:[#allocation5 + $0x7d8] sm:$0xff] %v793
    %1306 = vst [vmem:[#allocation5 + $0x7e0] sm:$0xff] %v794
    %1307 = vst [vmem:[#allocation5 + $0x7e8] sm:$0xff] %v795
    %1308 = vst [vmem:[#allocation5 + $0x7f0] sm:$0xff] %v796
    %1309 = vst [vmem:[#allocation5 + $0x7f8] sm:$0xff] %v797
    %1310 = vst [vmem:[#allocation5 + $0x800] sm:$0xff] %v798
    %1311 = vst [vmem:[#allocation5 + $0x808] sm:$0xff] %v799
    %1312 = vst [vmem:[#allocation5 + $0x810] sm:$0xff] %v800
    %1313 = vst [vmem:[#allocation5 + $0x818] sm:$0xff] %v801
    %1314 = vst [vmem:[#allocation5 + $0x820] sm:$0xff] %v802
    %1315 = vst [vmem:[#allocation5 + $0x828] sm:$0xff] %v803
    %1316 = vst [vmem:[#allocation5 + $0x830] sm:$0xff] %v804
    %1317 = vst [vmem:[#allocation5 + $0x838] sm:$0xff] %v805
    %1318 = vst [vmem:[#allocation5 + $0x840] sm:$0xff] %v806
    %1319 = vst [vmem:[#allocation5 + $0x848] sm:$0xff] %v807
    %1320 = vst [vmem:[#allocation5 + $0x850] sm:$0xff] %v808
    %1321 = vst [vmem:[#allocation5 + $0x858] sm:$0xff] %v809
    %1322 = vst [vmem:[#allocation5 + $0x860] sm:$0xff] %v810
    %1323 = vst [vmem:[#allocation5 + $0x868] sm:$0xff] %v811
    %1324 = vst [vmem:[#allocation5 + $0x870] sm:$0xff] %v812
    %1325 = vst [vmem:[#allocation5 + $0x878] sm:$0xff] %v813
    %1326 = vst [vmem:[#allocation5 + $0x880] sm:$0xff] %v814
    %1327 = vst [vmem:[#allocation5 + $0x888] sm:$0xff] %v815
    %1328 = vst [vmem:[#allocation5 + $0x890] sm:$0xff] %v816
    %1329 = vst [vmem:[#allocation5 + $0x898] sm:$0xff] %v817
    %1330 = vst [vmem:[#allocation5 + $0x8a0] sm:$0xff] %v818
    %1331 = vst [vmem:[#allocation5 + $0x8a8] sm:$0xff] %v819
    %1332 = vst [vmem:[#allocation5 + $0x8b0] sm:$0xff] %v820
    %1333 = vst [vmem:[#allocation5 + $0x8b8] sm:$0xff] %v821
    %1334 = vst [vmem:[#allocation5 + $0x8c0] sm:$0xff] %v822
    %1335 = vst [vmem:[#allocation5 + $0x8c8] sm:$0xff] %v823
    %1336 = vst [vmem:[#allocation5 + $0x8d0] sm:$0xff] %v824
    %1337 = vst [vmem:[#allocation5 + $0x8d8] sm:$0xff] %v825
    %1338 = vst [vmem:[#allocation5 + $0x8e0] sm:$0xff] %v826
    %1339 = vst [vmem:[#allocation5 + $0x8e8] sm:$0xff] %v827
    %1340 = vst [vmem:[#allocation5 + $0x8f0] sm:$0xff] %v828
    %1341 = vst [vmem:[#allocation5 + $0x8f8] sm:$0xff] %v829
    %1342 = vst [vmem:[#allocation5 + $0x900] sm:$0xff] %v830
    %1343 = vst [vmem:[#allocation5 + $0x908] sm:$0xff] %v831
    %1344 = vst [vmem:[#allocation5 + $0x910] sm:$0xff] %v832
    %1345 = vst [vmem:[#allocation5 + $0x918] sm:$0xff] %v833
    %1346 = vst [vmem:[#allocation5 + $0x920] sm:$0xff] %v834
    %1347 = vst [vmem:[#allocation5 + $0x928] sm:$0xff] %v835
    %1348 = vst [vmem:[#allocation5 + $0x930] sm:$0xff] %v836
    %1349 = vst [vmem:[#allocation5 + $0x938] sm:$0xff] %v837
    %1350 = vst [vmem:[#allocation5 + $0x940] sm:$0xff] %v838
    %1351 = vst [vmem:[#allocation5 + $0x948] sm:$0xff] %v839
    %1352 = vst [vmem:[#allocation5 + $0x950] sm:$0xff] %v840
    %1353 = vst [vmem:[#allocation5 + $0x958] sm:$0xff] %v841
    %1354 = vst [vmem:[#allocation5 + $0x960] sm:$0xff] %v842
    %1355 = vst [vmem:[#allocation5 + $0x968] sm:$0xff] %v843
    %1356 = vst [vmem:[#allocation5 + $0x970] sm:$0xff] %v844
    %1357 = vst [vmem:[#allocation5 + $0x978] sm:$0xff] %v845
    %1358 = vst [vmem:[#allocation5 + $0x980] sm:$0xff] %v846
    %1359 = vst [vmem:[#allocation5 + $0x988] sm:$0xff] %v847
    %1360 = vst [vmem:[#allocation5 + $0x990] sm:$0xff] %v848
    %1361 = vst [vmem:[#allocation5 + $0x998] sm:$0xff] %v849
    %1362 = vst [vmem:[#allocation5 + $0x9a0] sm:$0xff] %v850
    %1363 = vst [vmem:[#allocation5 + $0x9a8] sm:$0xff] %v851
    %1364 = vst [vmem:[#allocation5 + $0x9b0] sm:$0xff] %v852
    %1365 = vst [vmem:[#allocation5 + $0x9b8] sm:$0xff] %v853
    %1366 = vst [vmem:[#allocation5 + $0x9c0] sm:$0xff] %v854
    %1367 = vst [vmem:[#allocation5 + $0x9c8] sm:$0xff] %v855
    %1368 = vst [vmem:[#allocation5 + $0x9d0] sm:$0xff] %v856
    %1369 = vst [vmem:[#allocation5 + $0x9d8] sm:$0xff] %v857
    %1370 = vst [vmem:[#allocation5 + $0x9e0] sm:$0xff] %v858
    %1371 = vst [vmem:[#allocation5 + $0x9e8] sm:$0xff] %v859
    %1372 = vst [vmem:[#allocation5 + $0x9f0] sm:$0xff] %v860
    %1373 = vst [vmem:[#allocation5 + $0x9f8] sm:$0xff] %v861
    %1374 = vst [vmem:[#allocation5 + $0xa00] sm:$0xff] %v862
    %1375 = vst [vmem:[#allocation5 + $0xa08] sm:$0xff] %v863
    %1376 = vst [vmem:[#allocation5 + $0xa10] sm:$0xff] %v864
    %1377 = vst [vmem:[#allocation5 + $0xa18] sm:$0xff] %v865
    %1378 = vst [vmem:[#allocation5 + $0xa20] sm:$0xff] %v866
    %1379 = vst [vmem:[#allocation5 + $0xa28] sm:$0xff] %v867
    %1380 = vst [vmem:[#allocation5 + $0xa30] sm:$0xff] %v868
    %1381 = vst [vmem:[#allocation5 + $0xa38] sm:$0xff] %v869
    %1382 = vst [vmem:[#allocation5 + $0xa40] sm:$0xff] %v870
    %1383 = vst [vmem:[#allocation5 + $0xa48] sm:$0xff] %v871
    %1384 = vst [vmem:[#allocation5 + $0xa50] sm:$0xff] %v872
    %1385 = vst [vmem:[#allocation5 + $0xa58] sm:$0xff] %v873
    %1386 = vst [vmem:[#allocation5 + $0xa60] sm:$0xff] %v874
    %1387 = vst [vmem:[#allocation5 + $0xa68] sm:$0xff] %v875
    %1388 = vst [vmem:[#allocation5 + $0xa70] sm:$0xff] %v876
    %1389 = vst [vmem:[#allocation5 + $0xa78] sm:$0xff] %v877
    %1390 = vst [vmem:[#allocation5 + $0xa80] sm:$0xff] %v878
    %1391 = vst [vmem:[#allocation5 + $0xa88] sm:$0xff] %v879
    %1392 = vst [vmem:[#allocation5 + $0xa90] sm:$0xff] %v880
    %1393 = vst [vmem:[#allocation5 + $0xa98] sm:$0xff] %v881
    %1394 = vst [vmem:[#allocation5 + $0xaa0] sm:$0xff] %v882
    %1395 = vst [vmem:[#allocation5 + $0xaa8] sm:$0xff] %v883
    %1396 = vst [vmem:[#allocation5 + $0xab0] sm:$0xff] %v884
    %1397 = vst [vmem:[#allocation5 + $0xab8] sm:$0xff] %v885
    %1398 = vst [vmem:[#allocation5 + $0xac0] sm:$0xff] %v886
    %1399 = vst [vmem:[#allocation5 + $0xac8] sm:$0xff] %v887
    %1400 = vst [vmem:[#allocation5 + $0xad0] sm:$0xff] %v888
    %1401 = vst [vmem:[#allocation5 + $0xad8] sm:$0xff] %v889
    %1402 = vst [vmem:[#allocation5 + $0xae0] sm:$0xff] %v890
    %1403 = vst [vmem:[#allocation5 + $0xae8] sm:$0xff] %v891
    %1404 = vst [vmem:[#allocation5 + $0xaf0] sm:$0xff] %v892
    %1405 = vst [vmem:[#allocation5 + $0xaf8] sm:$0xff] %v893
    %1406 = vst [vmem:[#allocation5 + $0xb00] sm:$0xff] %v894
    %1407 = vst [vmem:[#allocation5 + $0xb08] sm:$0xff] %v895
    %1408 = vst [vmem:[#allocation5 + $0xb10] sm:$0xff] %v896
    %1409 = vst [vmem:[#allocation5 + $0xb18] sm:$0xff] %v897
    %1410 = vst [vmem:[#allocation5 + $0xb20] sm:$0xff] %v898
    %1411 = vst [vmem:[#allocation5 + $0xb28] sm:$0xff] %v899
    %1412 = vst [vmem:[#allocation5 + $0xb30] sm:$0xff] %v900
    %1413 = vst [vmem:[#allocation5 + $0xb38] sm:$0xff] %v901
    %1414 = vst [vmem:[#allocation5 + $0xb40] sm:$0xff] %v902
    %1415 = vst [vmem:[#allocation5 + $0xb48] sm:$0xff] %v903
    %1416 = vst [vmem:[#allocation5 + $0xb50] sm:$0xff] %v904
    %1417 = vst [vmem:[#allocation5 + $0xb58] sm:$0xff] %v905
    %1418 = vst [vmem:[#allocation5 + $0xb60] sm:$0xff] %v906
    %1419 = vst [vmem:[#allocation5 + $0xb68] sm:$0xff] %v907
    %1420 = vst [vmem:[#allocation5 + $0xb70] sm:$0xff] %v908
    %1421 = vst [vmem:[#allocation5 + $0xb78] sm:$0xff] %v909
    %1422 = vst [vmem:[#allocation5 + $0xb80] sm:$0xff] %v910
    %1423 = vst [vmem:[#allocation5 + $0xb88] sm:$0xff] %v911
    %1424 = vst [vmem:[#allocation5 + $0xb90] sm:$0xff] %v912
    %1425 = vst [vmem:[#allocation5 + $0xb98] sm:$0xff] %v913
    %1426 = vst [vmem:[#allocation5 + $0xba0] sm:$0xff] %v914
    %1427 = vst [vmem:[#allocation5 + $0xba8] sm:$0xff] %v915
    %1428 = vst [vmem:[#allocation5 + $0xbb0] sm:$0xff] %v916
    %1429 = vst [vmem:[#allocation5 + $0xbb8] sm:$0xff] %v917
    %1430 = vst [vmem:[#allocation5 + $0xbc0] sm:$0xff] %v918
    %1431 = vst [vmem:[#allocation5 + $0xbc8] sm:$0xff] %v919
    %1432 = vst [vmem:[#allocation5 + $0xbd0] sm:$0xff] %v920
    %1433 = vst [vmem:[#allocation5 + $0xbd8] sm:$0xff] %v921
    %1434 = vst [vmem:[#allocation5 + $0xbe0] sm:$0xff] %v922
    %1435 = vst [vmem:[#allocation5 + $0xbe8] sm:$0xff] %v923
    %1436 = vst [vmem:[#allocation5 + $0xbf0] sm:$0xff] %v924
    %1437 = vst [vmem:[#allocation5 + $0xbf8] sm:$0xff] %v925
    %1438 = vst [vmem:[#allocation5 + $0xc00] sm:$0xff] %v926
    %1439 = vst [vmem:[#allocation5 + $0xc08] sm:$0xff] %v927
    %1440 = vst [vmem:[#allocation5 + $0xc10] sm:$0xff] %v928
    %1441 = vst [vmem:[#allocation5 + $0xc18] sm:$0xff] %v929
    %1442 = vst [vmem:[#allocation5 + $0xc20] sm:$0xff] %v930
    %1443 = vst [vmem:[#allocation5 + $0xc28] sm:$0xff] %v931
    %1444 = vst [vmem:[#allocation5 + $0xc30] sm:$0xff] %v932
    %1445 = vst [vmem:[#allocation5 + $0xc38] sm:$0xff] %v933
    %1446 = vst [vmem:[#allocation5 + $0xc40] sm:$0xff] %v934
    %1447 = vst [vmem:[#allocation5 + $0xc48] sm:$0xff] %v935
    %1448 = vst [vmem:[#allocation5 + $0xc50] sm:$0xff] %v936
    %1449 = vst [vmem:[#allocation5 + $0xc58] sm:$0xff] %v937
    %1450 = vst [vmem:[#allocation5 + $0xc60] sm:$0xff] %v938
    %1451 = vst [vmem:[#allocation5 + $0xc68] sm:$0xff] %v939
    %1452 = vst [vmem:[#allocation5 + $0xc70] sm:$0xff] %v940
    %1453 = vst [vmem:[#allocation5 + $0xc78] sm:$0xff] %v941
    %1454 = vst [vmem:[#allocation5 + $0xc80] sm:$0xff] %v942
    %1455 = vst [vmem:[#allocation5 + $0xc88] sm:$0xff] %v943
    %1456 = vst [vmem:[#allocation5 + $0xc90] sm:$0xff] %v944
    %1457 = vst [vmem:[#allocation5 + $0xc98] sm:$0xff] %v945
    %1458 = vst [vmem:[#allocation5 + $0xca0] sm:$0xff] %v946
    %1459 = vst [vmem:[#allocation5 + $0xca8] sm:$0xff] %v947
    %1460 = vst [vmem:[#allocation5 + $0xcb0] sm:$0xff] %v948
    %1461 = vst [vmem:[#allocation5 + $0xcb8] sm:$0xff] %v949
    %1462 = vst [vmem:[#allocation5 + $0xcc0] sm:$0xff] %v950
    %1463 = vst [vmem:[#allocation5 + $0xcc8] sm:$0xff] %v951
    %1464 = vst [vmem:[#allocation5 + $0xcd0] sm:$0xff] %v952
    %1465 = vst [vmem:[#allocation5 + $0xcd8] sm:$0xff] %v953
    %1466 = vst [vmem:[#allocation5 + $0xce0] sm:$0xff] %v954
    %1467 = vst [vmem:[#allocation5 + $0xce8] sm:$0xff] %v955
    %1468 = vst [vmem:[#allocation5 + $0xcf0] sm:$0xff] %v956
    %1469 = vst [vmem:[#allocation5 + $0xcf8] sm:$0xff] %v957
    %1470 = vst [vmem:[#allocation5 + $0xd00] sm:$0xff] %v958
    %1471 = vst [vmem:[#allocation5 + $0xd08] sm:$0xff] %v959
    %1472 = vst [vmem:[#allocation5 + $0xd10] sm:$0xff] %v960
    %1473 = vst [vmem:[#allocation5 + $0xd18] sm:$0xff] %v961
    %1474 = vst [vmem:[#allocation5 + $0xd20] sm:$0xff] %v962
    %1475 = vst [vmem:[#allocation5 + $0xd28] sm:$0xff] %v963
    %1476 = vst [vmem:[#allocation5 + $0xd30] sm:$0xff] %v964
    %1477 = vst [vmem:[#allocation5 + $0xd38] sm:$0xff] %v965
    %1478 = vst [vmem:[#allocation5 + $0xd40] sm:$0xff] %v966
    %1479 = vst [vmem:[#allocation5 + $0xd48] sm:$0xff] %v967
    %1480 = vst [vmem:[#allocation5 + $0xd50] sm:$0xff] %v968
    %1481 = vst [vmem:[#allocation5 + $0xd58] sm:$0xff] %v969
    %1482 = vst [vmem:[#allocation5 + $0xd60] sm:$0xff] %v970
    %1483 = vst [vmem:[#allocation5 + $0xd68] sm:$0xff] %v971
    %1484 = vst [vmem:[#allocation5 + $0xd70] sm:$0xff] %v972
    %1485 = vst [vmem:[#allocation5 + $0xd78] sm:$0xff] %v973
    %1486 = vst [vmem:[#allocation5 + $0xd80] sm:$0xff] %v974
    %1487 = vst [vmem:[#allocation5 + $0xd88] sm:$0xff] %v975
    %1488 = vst [vmem:[#allocation5 + $0xd90] sm:$0xff] %v976
    %1489 = vst [vmem:[#allocation5 + $0xd98] sm:$0xff] %v977
    %1490 = vst [vmem:[#allocation5 + $0xda0] sm:$0xff] %v978
    %1491 = vst [vmem:[#allocation5 + $0xda8] sm:$0xff] %v979
    %1492 = vst [vmem:[#allocation5 + $0xdb0] sm:$0xff] %v980
    %1493 = vst [vmem:[#allocation5 + $0xdb8] sm:$0xff] %v981
    %1494 = vst [vmem:[#allocation5 + $0xdc0] sm:$0xff] %v982
    %1495 = vst [vmem:[#allocation5 + $0xdc8] sm:$0xff] %v983
    %1496 = vst [vmem:[#allocation5 + $0xdd0] sm:$0xff] %v984
    %1497 = vst [vmem:[#allocation5 + $0xdd8] sm:$0xff] %v985
    %1498 = vst [vmem:[#allocation5 + $0xde0] sm:$0xff] %v986
    %1499 = vst [vmem:[#allocation5 + $0xde8] sm:$0xff] %v987
    %1500 = vst [vmem:[#allocation5 + $0xdf0] sm:$0xff] %v988
    %1501 = vst [vmem:[#allocation5 + $0xdf8] sm:$0xff] %v989
    %1502 = vst [vmem:[#allocation5 + $0xe00] sm:$0xff] %v990
    %1503 = vst [vmem:[#allocation5 + $0xe08] sm:$0xff] %v991
    %1504 = vst [vmem:[#allocation5 + $0xe10] sm:$0xff] %v992
    %1505 = vst [vmem:[#allocation5 + $0xe18] sm:$0xff] %v993
    %1506 = vst [vmem:[#allocation5 + $0xe20] sm:$0xff] %v994
    %1507 = vst [vmem:[#allocation5 + $0xe28] sm:$0xff] %v995
    %1508 = vst [vmem:[#allocation5 + $0xe30] sm:$0xff] %v996
    %1509 = vst [vmem:[#allocation5 + $0xe38] sm:$0xff] %v997
    %1510 = vst [vmem:[#allocation5 + $0xe40] sm:$0xff] %v998
    %1511 = vst [vmem:[#allocation5 + $0xe48] sm:$0xff] %v999
    %1512 = vst [vmem:[#allocation5 + $0xe50] sm:$0xff] %v1000
    %1513 = vst [vmem:[#allocation5 + $0xe58] sm:$0xff] %v1001
    %1514 = vst [vmem:[#allocation5 + $0xe60] sm:$0xff] %v1002
    %1515 = vst [vmem:[#allocation5 + $0xe68] sm:$0xff] %v1003
    %1516 = vst [vmem:[#allocation5 + $0xe70] sm:$0xff] %v1004
    %1517 = vst [vmem:[#allocation5 + $0xe78] sm:$0xff] %v1005
    %1518 = vst [vmem:[#allocation5 + $0xe80] sm:$0xff] %v1006
    %1519 = vst [vmem:[#allocation5 + $0xe88] sm:$0xff] %v1007
    %1520 = vst [vmem:[#allocation5 + $0xe90] sm:$0xff] %v1008
    %1521 = vst [vmem:[#allocation5 + $0xe98] sm:$0xff] %v1009
    %1522 = vst [vmem:[#allocation5 + $0xea0] sm:$0xff] %v1010
    %1523 = vst [vmem:[#allocation5 + $0xea8] sm:$0xff] %v1011
    %1524 = vst [vmem:[#allocation5 + $0xeb0] sm:$0xff] %v1012
    %1525 = vst [vmem:[#allocation5 + $0xeb8] sm:$0xff] %v1013
    %1526 = vst [vmem:[#allocation5 + $0xec0] sm:$0xff] %v1014
    %1527 = vst [vmem:[#allocation5 + $0xec8] sm:$0xff] %v1015
    %1528 = vst [vmem:[#allocation5 + $0xed0] sm:$0xff] %v1016
    %1529 = vst [vmem:[#allocation5 + $0xed8] sm:$0xff] %v1017
    %1530 = vst [vmem:[#allocation5 + $0xee0] sm:$0xff] %v1018
    %1531 = vst [vmem:[#allocation5 + $0xee8] sm:$0xff] %v1019
    %1532 = vst [vmem:[#allocation5 + $0xef0] sm:$0xff] %v1020
    %1533 = vst [vmem:[#allocation5 + $0xef8] sm:$0xff] %v1021
    %1534 = vst [vmem:[#allocation5 + $0xf00] sm:$0xff] %v1022
    %1535 = vst [vmem:[#allocation5 + $0xf08] sm:$0xff] %v1023
    %1536 = vst [vmem:[#allocation5 + $0xf10] sm:$0xff] %v1024
    %1537 = vst [vmem:[#allocation5 + $0xf18] sm:$0xff] %v1025
    %1538 = vst [vmem:[#allocation5 + $0xf20] sm:$0xff] %v1026
    %1539 = vst [vmem:[#allocation5 + $0xf28] sm:$0xff] %v1027
    %1540 = vst [vmem:[#allocation5 + $0xf30] sm:$0xff] %v1028
    %1541 = vst [vmem:[#allocation5 + $0xf38] sm:$0xff] %v1029
    %1542 = vst [vmem:[#allocation5 + $0xf40] sm:$0xff] %v1030
    %1543 = vst [vmem:[#allocation5 + $0xf48] sm:$0xff] %v1031
    %1544 = vst [vmem:[#allocation5 + $0xf50] sm:$0xff] %v1032
    %1545 = vst [vmem:[#allocation5 + $0xf58] sm:$0xff] %v1033
    %1546 = vst [vmem:[#allocation5 + $0xf60] sm:$0xff] %v1034
    %1547 = vst [vmem:[#allocation5 + $0xf68] sm:$0xff] %v1035
    %1548 = vst [vmem:[#allocation5 + $0xf70] sm:$0xff] %v1036
    %1549 = vst [vmem:[#allocation5 + $0xf78] sm:$0xff] %v1037
    %1550 = vst [vmem:[#allocation5 + $0xf80] sm:$0xff] %v1038
    %1551 = vst [vmem:[#allocation5 + $0xf88] sm:$0xff] %v1039
    %1552 = vst [vmem:[#allocation5 + $0xf90] sm:$0xff] %v1040
    %1553 = vst [vmem:[#allocation5 + $0xf98] sm:$0xff] %v1041
    %1554 = vst [vmem:[#allocation5 + $0xfa0] sm:$0xff] %v1042
    %1555 = vst [vmem:[#allocation5 + $0xfa8] sm:$0xff] %v1043
    %1556 = vst [vmem:[#allocation5 + $0xfb0] sm:$0xff] %v1044
    %1557 = vst [vmem:[#allocation5 + $0xfb8] sm:$0xff] %v1045
    %1558 = vst [vmem:[#allocation5 + $0xfc0] sm:$0xff] %v1046
    %1559 = vst [vmem:[#allocation5 + $0xfc8] sm:$0xff] %v1047
    %1560 = vst [vmem:[#allocation5 + $0xfd0] sm:$0xff] %v1048
    %1561 = vst [vmem:[#allocation5 + $0xfd8] sm:$0xff] %v1049
    %1562 = vst [vmem:[#allocation5 + $0xfe0] sm:$0xff] %v1050
    %1563 = vst [vmem:[#allocation5 + $0xfe8] sm:$0xff] %v1051
    %1564 = vst [vmem:[#allocation5 + $0xff0] sm:$0xff] %v1052
    %1565 = vst [vmem:[#allocation5 + $0xff8] sm:$0xff] %v1053
    // Predicated region
    $region14: #{tpu_custom_call.1} parent=1 // pred_check
      _
    $region15: #{tpu_custom_call.1} parent=1 // pred_check_branch
      %1567 = sbr.rel (0) target = $region17
    $region16: #{tpu_custom_call.1} parent=1 // pred_region
      %s1569 = ssub.s32 65536, 65536
      %1570 = vsyncadd [#allocation4], %s1569
      %s1572 = sshll.u32 [#allocation5], 4
      %s1573 = int_to_ptr.vmem [resolvable:$true] %s1572
      %1575 = dma.vmem_to_hbm [thread:$0]  %s1573, 65536, %s2, [#allocation4]
    $region17: #{tpu_custom_call.1} parent=1 // pred_fallthru
      _
    // Predicated region
    $region18: #{tpu_custom_call.1} parent=1 // pred_check
      _
    $region19: #{tpu_custom_call.1} parent=1 // pred_check_branch
      %1577 = sbr.rel (0) target = $region21
    $region20: #{tpu_custom_call.1} parent=1 // pred_region
      %1578 = dma.done [#allocation4], 65536
    $region21: #{tpu_custom_call.1} parent=1 // pred_fallthru
      _
    %1579 = vsyncpa [#allocation3], 1
    %1580 = vsyncpa [#allocation4], 1

</llo_original>
